<compile_context>
chip_gen: v6e
topology: v6e:2x2x1
jax: 0.10.0
libtpu: 0.0.40
codegen_flags: <defaults>
</compile_context>

<pallas_src>
import jax
import jax.numpy as jnp
import numpy as np
from jax.experimental import pallas as pl
from jax.experimental.pallas import tpu as pltpu  # noqa: F401

# ---- model hparams (small, consistent with the module) ----
EHD = 16                 # model_hparams['energies_hidden_dim']
NET = 2                  # model_hparams['num_edge_transfer']
E = EHD * NET            # LightAttention embeddings_dim = 32
K = 9                    # Conv1d kernel size (padding = K // 2, "same")
LA_HIDDEN = 32           # LightAttention internal linear width
LA_OUT = 11              # LightAttention output_dim (default)
EDGE_IN = (11, 32)       # model_hparams['edge_transfer_in']
EDGE_OUT = (32, 16)      # model_hparams['edge_transfer_out']
BN_EPS = 1e-5

L = 16                   # sequence length
B = 2                    # batch
PAD = K // 2
LP = L + 2 * PAD         # 24
CPAD = 256               # fused conv width: feature -> lanes [0,E), attention -> [128,128+E)
CAT = 256                # vreg-aligned [o1 | o2] concat width (o2 starts at lane 128)
OUT_PAD = 128            # lane-dense output width; true output width = EDGE_OUT[-1]


def _energy_transfer_kernel(
    xp_ref,                # (B, LP, E)      f32   padded, channels-last input
    wconv_ref,             # (K, E, CPAD)    bf16  fused per-tap conv weight (lane-padded)
    bconv_ref,             # (1, CPAD)       f32   fused conv bias (same lane layout)
    w1_ref, b1_ref,        # (CAT, 32) bf16, (1, 32) f32   LA linear (rows re-laid for cat)
    wo_ref, bo_ref,        # (32, LA_OUT) bf16, (1, LA_OUT) f32   LA output, BN folded in
    we1_ref, be1_ref,      # (EDGE_IN[0], EDGE_OUT[0]) bf16, (1, EDGE_OUT[0]) f32
    we2_ref, be2_ref,      # (EDGE_IN[1], OUT_PAD) bf16, (1, OUT_PAD) f32  (lane-padded)
    out_ref,               # (B, OUT_PAD)    f32
):
    x = xp_ref[...]                                                    # (B, LP, E) f32

    # ---- both Conv1d's ("same" padding): 9 accumulating MXU matmuls, in-kernel taps ----
    xs0 = x[:, 0:L, :].reshape(B * L, E).astype(jnp.bfloat16)
    conv = jnp.dot(xs0, wconv_ref[0], preferred_element_type=jnp.float32)
    for k in range(1, K):                                              # static unroll (9 taps)
        xs = x[:, k:k + L, :].reshape(B * L, E).astype(jnp.bfloat16)
        conv = conv + jnp.dot(xs, wconv_ref[k], preferred_element_type=jnp.float32)
    conv = conv.reshape(B, L, CPAD) + bconv_ref[...]                   # (B, L, CPAD) f32

    # vreg-aligned split: feature in first 128 lanes, attention in second 128 lanes
    o = conv[:, :, :128]          # real channels in lanes [0, E); padding lanes are zero
    a = conv[:, :, 128:]
    # dropout after feature conv: identity at inference
    # TODO(synk): no length mask is applied before softmax — assumes fixed full length L.

    # ---- softmax over the length axis (torch dim=-1 on (B, E, L)); f32 VPU/EUP math ----
    a = a - jnp.max(a, axis=1, keepdims=True)
    p = jnp.exp(a)
    sm = p * pl.reciprocal(jnp.sum(p, axis=1, keepdims=True), approx=True)

    o1 = jnp.sum(o * sm, axis=1)                                       # (B, 128)
    o2 = jnp.max(o, axis=1)                                            # (B, 128)
    cat = jnp.concatenate([o1, o2], axis=-1).astype(jnp.bfloat16)      # (B, 256), 128-aligned

    # ---- LightAttention head: Linear -> (Dropout) -> ReLU -> BN(folded) -> Linear ----
    h = jnp.dot(cat, w1_ref[...], preferred_element_type=jnp.float32) + b1_ref[...]
    h = jnp.maximum(h, 0.0)
    la = jnp.dot(h.astype(jnp.bfloat16), wo_ref[...],
                 preferred_element_type=jnp.float32) + bo_ref[...]     # BN folded into wo/bo

    # ---- energy_out: [ReLU, Linear] x 2 (last Linear lane-padded to OUT_PAD) ----
    t = jnp.maximum(la, 0.0)
    t = jnp.dot(t.astype(jnp.bfloat16), we1_ref[...],
                preferred_element_type=jnp.float32) + be1_ref[...]
    t = jnp.maximum(t, 0.0)
    t = jnp.dot(t.astype(jnp.bfloat16), we2_ref[...],
                preferred_element_type=jnp.float32) + be2_ref[...]

    out_ref[...] = t                                                   # lane-dense store


@jax.jit
def energy_transfer_forward(x, kparams):
    """x: (B, E, L) float32 -- PyTorch NCL layout for Conv1d."""
    b, e, l = x.shape
    assert (b, e, l) == (B, E, L)
    # glue fused by XLA under this jit: pad + channels-last transpose only (no im2col)
    xp = jnp.pad(x, ((0, 0), (0, 0), (PAD, PAD)))                      # (B, E, LP)
    xp = jnp.transpose(xp, (0, 2, 1))                                  # (B, LP, E) f32

    out = pl.pallas_call(
        _energy_transfer_kernel,
        out_shape=jax.ShapeDtypeStruct((b, OUT_PAD), jnp.float32),
        # no grid: single invocation, every operand is a full-array VMEM block
    )(
        xp,
        kparams["wconv"], kparams["bconv"],
        kparams["w1p"], kparams["b1"],
        kparams["wo_f"], kparams["bo_f"],
        kparams["we1"], kparams["be1"],
        kparams["we2p"], kparams["be2p"],
    )
    return out[:, :EDGE_OUT[-1]]                                       # (B, 16)


def reference_forward(x, p):
    """Pure-JAX f32 reference with PyTorch semantics (tap loop, unfused BN)."""
    bsz = x.shape[0]
    xp = jnp.pad(x, ((0, 0), (0, 0), (PAD, PAD)))
    xp = jnp.transpose(xp, (0, 2, 1)).astype(jnp.float32)              # (B, LP, E)
    o = jnp.zeros((bsz, L, E), jnp.float32) + p["bf"]
    a = jnp.zeros((bsz, L, E), jnp.float32) + p["ba"]
    for k in range(K):
        xs = xp[:, k:k + L, :]
        o = o + jnp.einsum("ble,ef->blf", xs, p["wf"][k])
        a = a + jnp.einsum("ble,ef->blf", xs, p["wa"][k])
    sm = jax.nn.softmax(a, axis=1)
    o1 = jnp.sum(o * sm, axis=1)
    o2 = jnp.max(o, axis=1)
    cat = jnp.concatenate([o1, o2], axis=-1)
    h = jnp.maximum(cat @ p["w1"] + p["b1"], 0.0)
    h = h * p["bn_scale"] + p["bn_shift"]
    la = h @ p["wo"] + p["bo"]
    t = jnp.maximum(la, 0.0) @ p["we1"] + p["be1"]
    t = jnp.maximum(t, 0.0) @ p["we2"] + p["be2"]
    return t


def init_params(key):
    """Deterministic synthetic parameters (PyTorch layouts, packed for the kernel)."""
    ks = jax.random.split(key, 16)

    def unif(k, shape, fan_in):
        bound = 1.0 / jnp.sqrt(jnp.float32(fan_in))
        return jax.random.uniform(k, shape, jnp.float32, -bound, bound)

    # Conv1d weights, PyTorch layout (out, in, K) -> tap layout (K, in, out)
    wf_pt = unif(ks[0], (E, E, K), E * K)
    wa_pt = unif(ks[1], (E, E, K), E * K)
    wf = jnp.transpose(wf_pt, (2, 1, 0))
    wa = jnp.transpose(wa_pt, (2, 1, 0))
    bf = unif(ks[2], (1, E), E * K)
    ba = unif(ks[3], (1, E), E * K)

    # LightAttention Linear(2E, 32)
    w1_pt = unif(ks[4], (LA_HIDDEN, 2 * E), 2 * E)
    w1 = jnp.transpose(w1_pt)                                          # (2E, 32)
    b1 = unif(ks[5], (1, LA_HIDDEN), 2 * E)

    # BatchNorm1d(32), eval-mode running stats -> scale/shift
    gamma = 1.0 + 0.1 * jax.random.normal(ks[6], (1, LA_HIDDEN), jnp.float32)
    beta = 0.1 * jax.random.normal(ks[7], (1, LA_HIDDEN), jnp.float32)
    run_mean = 0.1 * jax.random.normal(ks[8], (1, LA_HIDDEN), jnp.float32)
    run_var = 0.5 + jax.random.uniform(ks[9], (1, LA_HIDDEN), jnp.float32)
    bn_scale = gamma / jnp.sqrt(run_var + BN_EPS)
    bn_shift = beta - run_mean * bn_scale

    # LightAttention output Linear(32, LA_OUT)
    wo_pt = unif(ks[10], (LA_OUT, LA_HIDDEN), LA_HIDDEN)
    wo = jnp.transpose(wo_pt)                                          # (32, 11)
    bo = unif(ks[11], (1, LA_OUT), LA_HIDDEN)

    # energy_out: Linear(11, 32), Linear(32, 16)
    we1_pt = unif(ks[12], (EDGE_OUT[0], EDGE_IN[0]), EDGE_IN[0])
    we1 = jnp.transpose(we1_pt)
    be1 = unif(ks[13], (1, EDGE_OUT[0]), EDGE_IN[0])
    we2_pt = unif(ks[14], (EDGE_OUT[1], EDGE_IN[1]), EDGE_IN[1])
    we2 = jnp.transpose(we2_pt)
    be2 = unif(ks[15], (1, EDGE_OUT[1]), EDGE_IN[1])

    rparams = dict(wf=wf, bf=bf, wa=wa, ba=ba, w1=w1, b1=b1,
                   bn_scale=bn_scale, bn_shift=bn_shift, wo=wo, bo=bo,
                   we1=we1, be1=be1, we2=we2, be2=be2)

    # ---------------- kernel-side packing (host-side, done once) ----------------
    # fused per-tap conv weight, lane-padded: feature -> lanes [0,E), attention -> [128,128+E)
    wconv = np.zeros((K, E, CPAD), np.float32)
    wconv[:, :, :E] = np.asarray(wf)
    wconv[:, :, 128:128 + E] = np.asarray(wa)
    bconv = np.zeros((1, CPAD), np.float32)
    bconv[:, :E] = np.asarray(bf)
    bconv[:, 128:128 + E] = np.asarray(ba)

    # LA linear rows re-laid out for the vreg-aligned [o1 | o2] concat (o2 at lane 128)
    w1p = np.zeros((CAT, LA_HIDDEN), np.float32)
    w1p[:E, :] = np.asarray(w1[:E])
    w1p[128:128 + E, :] = np.asarray(w1[E:])

    # fold eval-mode BatchNorm into the LA output linear: wo' = s*wo, bo' = bo + t@wo
    wo_f = np.asarray(wo) * np.asarray(bn_scale).reshape(LA_HIDDEN, 1)
    bo_f = np.asarray(bo) + np.asarray(bn_shift) @ np.asarray(wo)

    # lane-dense last linear: zero-pad output columns to OUT_PAD
    we2p = np.zeros((EDGE_IN[1], OUT_PAD), np.float32)
    we2p[:, :EDGE_OUT[1]] = np.asarray(we2)
    be2p = np.zeros((1, OUT_PAD), np.float32)
    be2p[:, :EDGE_OUT[1]] = np.asarray(be2)

    kparams = dict(
        wconv=jnp.asarray(wconv, jnp.bfloat16),
        bconv=jnp.asarray(bconv, jnp.float32),
        w1p=jnp.asarray(w1p, jnp.bfloat16),
        b1=b1,
        wo_f=jnp.asarray(wo_f, jnp.bfloat16),
        bo_f=jnp.asarray(bo_f, jnp.float32),
        we1=jnp.asarray(np.asarray(we1), jnp.bfloat16),
        be1=be1,
        we2p=jnp.asarray(we2p, jnp.bfloat16),
        be2p=jnp.asarray(be2p, jnp.float32),
    )
    return kparams, rparams


if __name__ == "__main__":
    key = jax.random.PRNGKey(0)
    k_x, k_p = jax.random.split(key)
    # PyTorch-style Conv1d input: (batch, channels, length)
    x = jax.random.normal(k_x, (B, E, L), jnp.float32)
    kparams, rparams = init_params(k_p)

    h_E = energy_transfer_forward(x, kparams)
    h_E = jax.block_until_ready(h_E)
    assert h_E.shape == (B, EDGE_OUT[-1])
    assert bool(jnp.all(jnp.isfinite(h_E)))

    # f32 unfused reference; loose tolerance accounts for bf16 MXU operands
    ref = reference_forward(x, rparams)
    max_err = float(jnp.max(jnp.abs(h_E - ref)))
    assert bool(jnp.allclose(h_E, ref, atol=5e-2, rtol=5e-2)), max_err

    print("KERNEL_OK")
</pallas_src>

<mosaic_0001>
module attributes {stable_mosaic.version = 11 : i64} {
  func.func @_energy_transfer_kernel(%arg0: memref<2x24x32xf32, #tpu.memory_space<vmem>>, %arg1: memref<9x32x256xbf16, #tpu.memory_space<vmem>>, %arg2: memref<1x256xf32, #tpu.memory_space<vmem>>, %arg3: memref<256x32xbf16, #tpu.memory_space<vmem>>, %arg4: memref<1x32xf32, #tpu.memory_space<vmem>>, %arg5: memref<32x11xbf16, #tpu.memory_space<vmem>>, %arg6: memref<1x11xf32, #tpu.memory_space<vmem>>, %arg7: memref<11x32xbf16, #tpu.memory_space<vmem>>, %arg8: memref<1x32xf32, #tpu.memory_space<vmem>>, %arg9: memref<32x128xbf16, #tpu.memory_space<vmem>>, %arg10: memref<1x128xf32, #tpu.memory_space<vmem>>, %arg11: memref<2x128xf32, #tpu.memory_space<vmem>>) attributes {dimension_semantics = [], scalar_prefetch = 0 : i64, scratch_operands = 0 : i64, tpu.core_type = #tpu.core_type<tc>} {
    %c0 = arith.constant 0 : index
    %c0_0 = arith.constant 0 : index
    %c0_1 = arith.constant 0 : index
    %0 = vector.load %arg0[%c0, %c0_0, %c0_1] : memref<2x24x32xf32, #tpu.memory_space<vmem>>, vector<2x24x32xf32>
    %1 = vector.extract_strided_slice %0 {offsets = [0, 0, 0], sizes = [2, 16, 32], strides = [1, 1, 1]} : vector<2x24x32xf32> to vector<2x16x32xf32>
    %2 = vector.shape_cast %1 : vector<2x16x32xf32> to vector<32x32xf32>
    %3 = arith.truncf %2 : vector<32x32xf32> to vector<32x32xbf16>
    %c0_2 = arith.constant 0 : index
    %c0_3 = arith.constant 0 : index
    %c0_4 = arith.constant 0 : index
    %4 = vector.load %arg1[%c0_2, %c0_3, %c0_4] : memref<9x32x256xbf16, #tpu.memory_space<vmem>>, vector<1x32x256xbf16>
    %5 = vector.shape_cast %4 : vector<1x32x256xbf16> to vector<32x256xbf16>
    %cst = arith.constant dense<0.000000e+00> : vector<32x256xf32>
    %6 = tpu.matmul %3, %5, %cst {dimension_numbers = #tpu.dot_dimension_numbers<[1], [0], [0], [1], [0, 0, 1, 1], [], []>} : vector<32x32xbf16>, vector<32x256xbf16>, vector<32x256xf32> -> vector<32x256xf32>
    %7 = vector.extract_strided_slice %0 {offsets = [0, 1, 0], sizes = [2, 16, 32], strides = [1, 1, 1]} : vector<2x24x32xf32> to vector<2x16x32xf32>
    %8 = vector.shape_cast %7 : vector<2x16x32xf32> to vector<32x32xf32>
    %9 = arith.truncf %8 : vector<32x32xf32> to vector<32x32xbf16>
    %c1 = arith.constant 1 : index
    %c0_5 = arith.constant 0 : index
    %c0_6 = arith.constant 0 : index
    %10 = vector.load %arg1[%c1, %c0_5, %c0_6] : memref<9x32x256xbf16, #tpu.memory_space<vmem>>, vector<1x32x256xbf16>
    %11 = vector.shape_cast %10 : vector<1x32x256xbf16> to vector<32x256xbf16>
    %cst_7 = arith.constant dense<0.000000e+00> : vector<32x256xf32>
    %12 = tpu.matmul %9, %11, %cst_7 {dimension_numbers = #tpu.dot_dimension_numbers<[1], [0], [0], [1], [0, 0, 1, 1], [], []>} : vector<32x32xbf16>, vector<32x256xbf16>, vector<32x256xf32> -> vector<32x256xf32>
    %13 = arith.addf %6, %12 : vector<32x256xf32>
    %14 = vector.extract_strided_slice %0 {offsets = [0, 2, 0], sizes = [2, 16, 32], strides = [1, 1, 1]} : vector<2x24x32xf32> to vector<2x16x32xf32>
    %15 = vector.shape_cast %14 : vector<2x16x32xf32> to vector<32x32xf32>
    %16 = arith.truncf %15 : vector<32x32xf32> to vector<32x32xbf16>
    %c2 = arith.constant 2 : index
    %c0_8 = arith.constant 0 : index
    %c0_9 = arith.constant 0 : index
    %17 = vector.load %arg1[%c2, %c0_8, %c0_9] : memref<9x32x256xbf16, #tpu.memory_space<vmem>>, vector<1x32x256xbf16>
    %18 = vector.shape_cast %17 : vector<1x32x256xbf16> to vector<32x256xbf16>
    %cst_10 = arith.constant dense<0.000000e+00> : vector<32x256xf32>
    %19 = tpu.matmul %16, %18, %cst_10 {dimension_numbers = #tpu.dot_dimension_numbers<[1], [0], [0], [1], [0, 0, 1, 1], [], []>} : vector<32x32xbf16>, vector<32x256xbf16>, vector<32x256xf32> -> vector<32x256xf32>
    %20 = arith.addf %13, %19 : vector<32x256xf32>
    %21 = vector.extract_strided_slice %0 {offsets = [0, 3, 0], sizes = [2, 16, 32], strides = [1, 1, 1]} : vector<2x24x32xf32> to vector<2x16x32xf32>
    %22 = vector.shape_cast %21 : vector<2x16x32xf32> to vector<32x32xf32>
    %23 = arith.truncf %22 : vector<32x32xf32> to vector<32x32xbf16>
    %c3 = arith.constant 3 : index
    %c0_11 = arith.constant 0 : index
    %c0_12 = arith.constant 0 : index
    %24 = vector.load %arg1[%c3, %c0_11, %c0_12] : memref<9x32x256xbf16, #tpu.memory_space<vmem>>, vector<1x32x256xbf16>
    %25 = vector.shape_cast %24 : vector<1x32x256xbf16> to vector<32x256xbf16>
    %cst_13 = arith.constant dense<0.000000e+00> : vector<32x256xf32>
    %26 = tpu.matmul %23, %25, %cst_13 {dimension_numbers = #tpu.dot_dimension_numbers<[1], [0], [0], [1], [0, 0, 1, 1], [], []>} : vector<32x32xbf16>, vector<32x256xbf16>, vector<32x256xf32> -> vector<32x256xf32>
    %27 = arith.addf %20, %26 : vector<32x256xf32>
    %28 = vector.extract_strided_slice %0 {offsets = [0, 4, 0], sizes = [2, 16, 32], strides = [1, 1, 1]} : vector<2x24x32xf32> to vector<2x16x32xf32>
    %29 = vector.shape_cast %28 : vector<2x16x32xf32> to vector<32x32xf32>
    %30 = arith.truncf %29 : vector<32x32xf32> to vector<32x32xbf16>
    %c4 = arith.constant 4 : index
    %c0_14 = arith.constant 0 : index
    %c0_15 = arith.constant 0 : index
    %31 = vector.load %arg1[%c4, %c0_14, %c0_15] : memref<9x32x256xbf16, #tpu.memory_space<vmem>>, vector<1x32x256xbf16>
    %32 = vector.shape_cast %31 : vector<1x32x256xbf16> to vector<32x256xbf16>
    %cst_16 = arith.constant dense<0.000000e+00> : vector<32x256xf32>
    %33 = tpu.matmul %30, %32, %cst_16 {dimension_numbers = #tpu.dot_dimension_numbers<[1], [0], [0], [1], [0, 0, 1, 1], [], []>} : vector<32x32xbf16>, vector<32x256xbf16>, vector<32x256xf32> -> vector<32x256xf32>
    %34 = arith.addf %27, %33 : vector<32x256xf32>
    %35 = vector.extract_strided_slice %0 {offsets = [0, 5, 0], sizes = [2, 16, 32], strides = [1, 1, 1]} : vector<2x24x32xf32> to vector<2x16x32xf32>
    %36 = vector.shape_cast %35 : vector<2x16x32xf32> to vector<32x32xf32>
    %37 = arith.truncf %36 : vector<32x32xf32> to vector<32x32xbf16>
    %c5 = arith.constant 5 : index
    %c0_17 = arith.constant 0 : index
    %c0_18 = arith.constant 0 : index
    %38 = vector.load %arg1[%c5, %c0_17, %c0_18] : memref<9x32x256xbf16, #tpu.memory_space<vmem>>, vector<1x32x256xbf16>
    %39 = vector.shape_cast %38 : vector<1x32x256xbf16> to vector<32x256xbf16>
    %cst_19 = arith.constant dense<0.000000e+00> : vector<32x256xf32>
    %40 = tpu.matmul %37, %39, %cst_19 {dimension_numbers = #tpu.dot_dimension_numbers<[1], [0], [0], [1], [0, 0, 1, 1], [], []>} : vector<32x32xbf16>, vector<32x256xbf16>, vector<32x256xf32> -> vector<32x256xf32>
    %41 = arith.addf %34, %40 : vector<32x256xf32>
    %42 = vector.extract_strided_slice %0 {offsets = [0, 6, 0], sizes = [2, 16, 32], strides = [1, 1, 1]} : vector<2x24x32xf32> to vector<2x16x32xf32>
    %43 = vector.shape_cast %42 : vector<2x16x32xf32> to vector<32x32xf32>
    %44 = arith.truncf %43 : vector<32x32xf32> to vector<32x32xbf16>
    %c6 = arith.constant 6 : index
    %c0_20 = arith.constant 0 : index
    %c0_21 = arith.constant 0 : index
    %45 = vector.load %arg1[%c6, %c0_20, %c0_21] : memref<9x32x256xbf16, #tpu.memory_space<vmem>>, vector<1x32x256xbf16>
    %46 = vector.shape_cast %45 : vector<1x32x256xbf16> to vector<32x256xbf16>
    %cst_22 = arith.constant dense<0.000000e+00> : vector<32x256xf32>
    %47 = tpu.matmul %44, %46, %cst_22 {dimension_numbers = #tpu.dot_dimension_numbers<[1], [0], [0], [1], [0, 0, 1, 1], [], []>} : vector<32x32xbf16>, vector<32x256xbf16>, vector<32x256xf32> -> vector<32x256xf32>
    %48 = arith.addf %41, %47 : vector<32x256xf32>
    %49 = vector.extract_strided_slice %0 {offsets = [0, 7, 0], sizes = [2, 16, 32], strides = [1, 1, 1]} : vector<2x24x32xf32> to vector<2x16x32xf32>
    %50 = vector.shape_cast %49 : vector<2x16x32xf32> to vector<32x32xf32>
    %51 = arith.truncf %50 : vector<32x32xf32> to vector<32x32xbf16>
    %c7 = arith.constant 7 : index
    %c0_23 = arith.constant 0 : index
    %c0_24 = arith.constant 0 : index
    %52 = vector.load %arg1[%c7, %c0_23, %c0_24] : memref<9x32x256xbf16, #tpu.memory_space<vmem>>, vector<1x32x256xbf16>
    %53 = vector.shape_cast %52 : vector<1x32x256xbf16> to vector<32x256xbf16>
    %cst_25 = arith.constant dense<0.000000e+00> : vector<32x256xf32>
    %54 = tpu.matmul %51, %53, %cst_25 {dimension_numbers = #tpu.dot_dimension_numbers<[1], [0], [0], [1], [0, 0, 1, 1], [], []>} : vector<32x32xbf16>, vector<32x256xbf16>, vector<32x256xf32> -> vector<32x256xf32>
    %55 = arith.addf %48, %54 : vector<32x256xf32>
    %56 = vector.extract_strided_slice %0 {offsets = [0, 8, 0], sizes = [2, 16, 32], strides = [1, 1, 1]} : vector<2x24x32xf32> to vector<2x16x32xf32>
    %57 = vector.shape_cast %56 : vector<2x16x32xf32> to vector<32x32xf32>
    %58 = arith.truncf %57 : vector<32x32xf32> to vector<32x32xbf16>
    %c8 = arith.constant 8 : index
    %c0_26 = arith.constant 0 : index
    %c0_27 = arith.constant 0 : index
    %59 = vector.load %arg1[%c8, %c0_26, %c0_27] : memref<9x32x256xbf16, #tpu.memory_space<vmem>>, vector<1x32x256xbf16>
    %60 = vector.shape_cast %59 : vector<1x32x256xbf16> to vector<32x256xbf16>
    %cst_28 = arith.constant dense<0.000000e+00> : vector<32x256xf32>
    %61 = tpu.matmul %58, %60, %cst_28 {dimension_numbers = #tpu.dot_dimension_numbers<[1], [0], [0], [1], [0, 0, 1, 1], [], []>} : vector<32x32xbf16>, vector<32x256xbf16>, vector<32x256xf32> -> vector<32x256xf32>
    %62 = arith.addf %55, %61 : vector<32x256xf32>
    %63 = vector.shape_cast %62 : vector<32x256xf32> to vector<2x16x256xf32>
    %c0_29 = arith.constant 0 : index
    %c0_30 = arith.constant 0 : index
    %64 = vector.load %arg2[%c0_29, %c0_30] : memref<1x256xf32, #tpu.memory_space<vmem>>, vector<1x256xf32>
    %65 = vector.shape_cast %64 : vector<1x256xf32> to vector<1x1x256xf32>
    %66 = vector.broadcast %65 : vector<1x1x256xf32> to vector<2x16x256xf32>
    %67 = arith.addf %63, %66 : vector<2x16x256xf32>
    %68 = vector.extract_strided_slice %67 {offsets = [0, 0, 0], sizes = [2, 16, 128], strides = [1, 1, 1]} : vector<2x16x256xf32> to vector<2x16x128xf32>
    %69 = vector.extract_strided_slice %67 {offsets = [0, 0, 128], sizes = [2, 16, 128], strides = [1, 1, 1]} : vector<2x16x256xf32> to vector<2x16x128xf32>
    %cst_31 = arith.constant dense<0xFF800000> : vector<2x128xf32>
    %70 = vector.multi_reduction <maximumf>, %69, %cst_31 [1] : vector<2x16x128xf32> to vector<2x128xf32>
    %71 = vector.shape_cast %70 : vector<2x128xf32> to vector<2x1x128xf32>
    %72 = vector.broadcast %71 : vector<2x1x128xf32> to vector<2x16x128xf32>
    %73 = arith.subf %69, %72 : vector<2x16x128xf32>
    %74 = math.exp %73 : vector<2x16x128xf32>
    %cst_32 = arith.constant dense<0.000000e+00> : vector<2x128xf32>
    %75 = vector.multi_reduction <add>, %74, %cst_32 [1] : vector<2x16x128xf32> to vector<2x128xf32>
    %76 = vector.shape_cast %75 : vector<2x128xf32> to vector<2x1x128xf32>
    %77 = tpu.reciprocal %76 {approx = true} : vector<2x1x128xf32> -> vector<2x1x128xf32>
    %78 = vector.broadcast %77 : vector<2x1x128xf32> to vector<2x16x128xf32>
    %79 = arith.mulf %74, %78 : vector<2x16x128xf32>
    %80 = arith.mulf %68, %79 : vector<2x16x128xf32>
    %cst_33 = arith.constant dense<0.000000e+00> : vector<2x128xf32>
    %81 = vector.multi_reduction <add>, %80, %cst_33 [1] : vector<2x16x128xf32> to vector<2x128xf32>
    %cst_34 = arith.constant dense<0xFF800000> : vector<2x128xf32>
    %82 = vector.multi_reduction <maximumf>, %68, %cst_34 [1] : vector<2x16x128xf32> to vector<2x128xf32>
    %83 = tpu.concatenate %81, %82 in 1 : vector<2x128xf32>, vector<2x128xf32> -> vector<2x256xf32>
    %84 = arith.truncf %83 : vector<2x256xf32> to vector<2x256xbf16>
    %c0_35 = arith.constant 0 : index
    %c0_36 = arith.constant 0 : index
    %85 = vector.load %arg3[%c0_35, %c0_36] : memref<256x32xbf16, #tpu.memory_space<vmem>>, vector<256x32xbf16>
    %cst_37 = arith.constant dense<0.000000e+00> : vector<2x32xf32>
    %86 = tpu.matmul %84, %85, %cst_37 {dimension_numbers = #tpu.dot_dimension_numbers<[1], [0], [0], [1], [0, 0, 1, 1], [], []>} : vector<2x256xbf16>, vector<256x32xbf16>, vector<2x32xf32> -> vector<2x32xf32>
    %c0_38 = arith.constant 0 : index
    %c0_39 = arith.constant 0 : index
    %87 = vector.load %arg4[%c0_38, %c0_39] : memref<1x32xf32, #tpu.memory_space<vmem>>, vector<1x32xf32>
    %88 = vector.broadcast %87 : vector<1x32xf32> to vector<2x32xf32>
    %89 = arith.addf %86, %88 : vector<2x32xf32>
    %cst_40 = arith.constant 0.000000e+00 : f32
    %90 = vector.broadcast %cst_40 : f32 to vector<2x32xf32>
    %91 = arith.maximumf %89, %90 : vector<2x32xf32>
    %92 = arith.truncf %91 : vector<2x32xf32> to vector<2x32xbf16>
    %c0_41 = arith.constant 0 : index
    %c0_42 = arith.constant 0 : index
    %93 = vector.load %arg5[%c0_41, %c0_42] : memref<32x11xbf16, #tpu.memory_space<vmem>>, vector<32x11xbf16>
    %cst_43 = arith.constant dense<0.000000e+00> : vector<2x11xf32>
    %94 = tpu.matmul %92, %93, %cst_43 {dimension_numbers = #tpu.dot_dimension_numbers<[1], [0], [0], [1], [0, 0, 1, 1], [], []>} : vector<2x32xbf16>, vector<32x11xbf16>, vector<2x11xf32> -> vector<2x11xf32>
    %c0_44 = arith.constant 0 : index
    %c0_45 = arith.constant 0 : index
    %95 = vector.load %arg6[%c0_44, %c0_45] : memref<1x11xf32, #tpu.memory_space<vmem>>, vector<1x11xf32>
    %96 = vector.broadcast %95 : vector<1x11xf32> to vector<2x11xf32>
    %97 = arith.addf %94, %96 : vector<2x11xf32>
    %cst_46 = arith.constant 0.000000e+00 : f32
    %98 = vector.broadcast %cst_46 : f32 to vector<2x11xf32>
    %99 = arith.maximumf %97, %98 : vector<2x11xf32>
    %100 = arith.truncf %99 : vector<2x11xf32> to vector<2x11xbf16>
    %c0_47 = arith.constant 0 : index
    %c0_48 = arith.constant 0 : index
    %101 = vector.load %arg7[%c0_47, %c0_48] : memref<11x32xbf16, #tpu.memory_space<vmem>>, vector<11x32xbf16>
    %cst_49 = arith.constant dense<0.000000e+00> : vector<2x32xf32>
    %102 = tpu.matmul %100, %101, %cst_49 {dimension_numbers = #tpu.dot_dimension_numbers<[1], [0], [0], [1], [0, 0, 1, 1], [], []>} : vector<2x11xbf16>, vector<11x32xbf16>, vector<2x32xf32> -> vector<2x32xf32>
    %c0_50 = arith.constant 0 : index
    %c0_51 = arith.constant 0 : index
    %103 = vector.load %arg8[%c0_50, %c0_51] : memref<1x32xf32, #tpu.memory_space<vmem>>, vector<1x32xf32>
    %104 = vector.broadcast %103 : vector<1x32xf32> to vector<2x32xf32>
    %105 = arith.addf %102, %104 : vector<2x32xf32>
    %cst_52 = arith.constant 0.000000e+00 : f32
    %106 = vector.broadcast %cst_52 : f32 to vector<2x32xf32>
    %107 = arith.maximumf %105, %106 : vector<2x32xf32>
    %108 = arith.truncf %107 : vector<2x32xf32> to vector<2x32xbf16>
    %c0_53 = arith.constant 0 : index
    %c0_54 = arith.constant 0 : index
    %109 = vector.load %arg9[%c0_53, %c0_54] : memref<32x128xbf16, #tpu.memory_space<vmem>>, vector<32x128xbf16>
    %cst_55 = arith.constant dense<0.000000e+00> : vector<2x128xf32>
    %110 = tpu.matmul %108, %109, %cst_55 {dimension_numbers = #tpu.dot_dimension_numbers<[1], [0], [0], [1], [0, 0, 1, 1], [], []>} : vector<2x32xbf16>, vector<32x128xbf16>, vector<2x128xf32> -> vector<2x128xf32>
    %c0_56 = arith.constant 0 : index
    %c0_57 = arith.constant 0 : index
    %111 = vector.load %arg10[%c0_56, %c0_57] : memref<1x128xf32, #tpu.memory_space<vmem>>, vector<1x128xf32>
    %112 = vector.broadcast %111 : vector<1x128xf32> to vector<2x128xf32>
    %113 = arith.addf %110, %112 : vector<2x128xf32>
    %c0_58 = arith.constant 0 : index
    %c0_59 = arith.constant 0 : index
    %114 = vector.load %arg11[%c0_58, %c0_59] : memref<2x128xf32, #tpu.memory_space<vmem>>, vector<2x128xf32>
    tpu.vector_store %arg11[%c0_58, %c0_59], %113 {strides = array<i32>} : memref<2x128xf32, #tpu.memory_space<vmem>>, vector<2x128xf32>,
    return
  }
}

</mosaic_0001>

<llo_original>
// kernel: energy_transfer_forward.1
$region0: #{energy_transfer_forward.1}
  #allocation0 [shape = 'u32[]', space=smem, size = 0x4, offset = 0x4, fixed_abs, tag = 'smem constant byte address 0x4 - core index']
  #allocation1 [shape = 'u32[144,128]{1,0:T(1,128)}', space=vmem, size = 0x12000, scoped, tag = 'internal scratch']
  %s0 = inlined_call_operand.vmem [shape: f32[2,24,32], index: 0, kind: input, shape index: {}]
  %s1 = inlined_call_operand.hbm [shape: bf16[9,32,256], index: 1, kind: input, shape index: {}]
  %s2 = inlined_call_operand.vmem [shape: f32[1,256], index: 2, kind: input, shape index: {}]
  %s3 = inlined_call_operand.vmem [shape: bf16[256,32], index: 3, kind: input, shape index: {}]
  %s4 = inlined_call_operand.vmem [shape: f32[1,32], index: 4, kind: input, shape index: {}]
  %s5 = inlined_call_operand.vmem [shape: bf16[32,11], index: 5, kind: input, shape index: {}]
  %s6 = inlined_call_operand.vmem [shape: f32[1,11], index: 6, kind: input, shape index: {}]
  %s7 = inlined_call_operand.vmem [shape: bf16[11,32], index: 7, kind: input, shape index: {}]
  %s8 = inlined_call_operand.vmem [shape: f32[1,32], index: 8, kind: input, shape index: {}]
  %s9 = inlined_call_operand.vmem [shape: bf16[32,128], index: 9, kind: input, shape index: {}]
  %s10 = inlined_call_operand.vmem [shape: f32[1,128], index: 10, kind: input, shape index: {}]
  %s11 = inlined_call_operand.hbm [shape: f32[2,128], index: 11, kind: output, shape index: {}]
  %s12 = sld [smem:[#allocation0]]
  $region58: #{energy_transfer_forward.1} parent=0
    _
  %s14 = ssub.s32 1, %s12
  %s15 = scalar_select 0, %s14, %s12
  $region1: #{energy_transfer_forward.1} parent=0
    #allocation2 [shape = 'u8[147456]{0}', space=vmem, size = 0x24000, scoped, tag = 'input window, operand 1, single buffered']
    #allocation3 [shape = 's32[1]{0}', space=sflag, size = 0x4, scoped, tag = 'scoped memory for energy_transfer_forward.1']
    #allocation4 [shape = 's32[1]{0}', space=sflag, size = 0x4, scoped, tag = 'scoped memory for energy_transfer_forward.1']
    #allocation5 [shape = 'u8[1024]{0}', space=vmem, size = 0x400, scoped, tag = 'output window, operand 0, single buffered']
    %16 = vsyncpa [#allocation3], 0
    %17 = vsyncpa [#allocation4], 0
    // Predicated region
    $region2: #{energy_transfer_forward.1} parent=1 // pred_check
      _
    $region3: #{energy_transfer_forward.1} parent=1 // pred_check_branch
      %19 = sbr.rel (0) target = $region5
    $region4: #{energy_transfer_forward.1} parent=1 // pred_region
      _
    $region5: #{energy_transfer_forward.1} parent=1 // pred_fallthru
      _
    // Predicated region
    $region6: #{energy_transfer_forward.1} parent=1 // pred_check
      _
    $region7: #{energy_transfer_forward.1} parent=1 // pred_check_branch
      %21 = sbr.rel (0) target = $region9
    $region8: #{energy_transfer_forward.1} parent=1 // pred_region
      %s23 = ssub.s32 4608, 4608
      %24 = vsyncadd [#allocation3], %s23
      %s25 = sshll.u32 [#allocation2], 4
      %s26 = int_to_ptr.vmem [resolvable:$true] %s25
      %31 = dma.hbm_to_vmem [thread:$0]  %s1, 4608, %s26, [#allocation3], 128, 128, 8
    $region9: #{energy_transfer_forward.1} parent=1 // pred_fallthru
      _
    // Predicated region
    $region10: #{energy_transfer_forward.1} parent=1 // pred_check
      _
    $region11: #{energy_transfer_forward.1} parent=1 // pred_check_branch
      %33 = sbr.rel (0) target = $region13
    $region12: #{energy_transfer_forward.1} parent=1 // pred_region
      _
    $region13: #{energy_transfer_forward.1} parent=1 // pred_fallthru
      _
    // Predicated region
    $region14: #{energy_transfer_forward.1} parent=1 // pred_check
      _
    $region15: #{energy_transfer_forward.1} parent=1 // pred_check_branch
      %35 = sbr.rel (0) target = $region17
    $region16: #{energy_transfer_forward.1} parent=1 // pred_region
      _
    $region17: #{energy_transfer_forward.1} parent=1 // pred_fallthru
      _
    // Predicated region
    $region18: #{energy_transfer_forward.1} parent=1 // pred_check
      _
    $region19: #{energy_transfer_forward.1} parent=1 // pred_check_branch
      %37 = sbr.rel (0) target = $region21
    $region20: #{energy_transfer_forward.1} parent=1 // pred_region
      _
    $region21: #{energy_transfer_forward.1} parent=1 // pred_fallthru
      _
    // Predicated region
    $region22: #{energy_transfer_forward.1} parent=1 // pred_check
      _
    $region23: #{energy_transfer_forward.1} parent=1 // pred_check_branch
      %39 = sbr.rel (0) target = $region25
    $region24: #{energy_transfer_forward.1} parent=1 // pred_region
      _
    $region25: #{energy_transfer_forward.1} parent=1 // pred_fallthru
      _
    // Predicated region
    $region26: #{energy_transfer_forward.1} parent=1 // pred_check
      _
    $region27: #{energy_transfer_forward.1} parent=1 // pred_check_branch
      %41 = sbr.rel (0) target = $region29
    $region28: #{energy_transfer_forward.1} parent=1 // pred_region
      _
    $region29: #{energy_transfer_forward.1} parent=1 // pred_fallthru
      _
    // Predicated region
    $region30: #{energy_transfer_forward.1} parent=1 // pred_check
      _
    $region31: #{energy_transfer_forward.1} parent=1 // pred_check_branch
      %43 = sbr.rel (0) target = $region33
    $region32: #{energy_transfer_forward.1} parent=1 // pred_region
      _
    $region33: #{energy_transfer_forward.1} parent=1 // pred_fallthru
      _
    // Predicated region
    $region34: #{energy_transfer_forward.1} parent=1 // pred_check
      _
    $region35: #{energy_transfer_forward.1} parent=1 // pred_check_branch
      %45 = sbr.rel (0) target = $region37
    $region36: #{energy_transfer_forward.1} parent=1 // pred_region
      _
    $region37: #{energy_transfer_forward.1} parent=1 // pred_fallthru
      _
    // Predicated region
    $region38: #{energy_transfer_forward.1} parent=1 // pred_check
      _
    $region39: #{energy_transfer_forward.1} parent=1 // pred_check_branch
      %47 = sbr.rel (0) target = $region41
    $region40: #{energy_transfer_forward.1} parent=1 // pred_region
      _
    $region41: #{energy_transfer_forward.1} parent=1 // pred_fallthru
      _
    // Predicated region
    $region42: #{energy_transfer_forward.1} parent=1 // pred_check
      _
    $region43: #{energy_transfer_forward.1} parent=1 // pred_check_branch
      %49 = sbr.rel (0) target = $region45
    $region44: #{energy_transfer_forward.1} parent=1 // pred_region
      _
    $region45: #{energy_transfer_forward.1} parent=1 // pred_fallthru
      _
    // Predicated region
    $region46: #{energy_transfer_forward.1} parent=1 // pred_check
      _
    $region47: #{energy_transfer_forward.1} parent=1 // pred_check_branch
      %51 = sbr.rel (0) target = $region49
    $region48: #{energy_transfer_forward.1} parent=1 // pred_region
      %52 = dma.done [#allocation3], 4608
    $region49: #{energy_transfer_forward.1} parent=1 // pred_fallthru
      _
    %v54 = vld [vmem:[%s0] sm:$0xff]
    %v55 = vld [vmem:[%s0 + $0x8] sm:$0xff]
    %v56 = vld [vmem:[%s0 + $0x10] sm:$0xff]
    %v57 = vld [vmem:[%s0 + $0x18] sm:$0xff]
    %v58 = vld [vmem:[%s0 + $0x20] sm:$0xff]
    %v59 = vld [vmem:[%s0 + $0x28] sm:$0xff]
    %v60 = vpack.c.bf16 %v55, %v54
    %v61 = vpack.c.bf16 %v58, %v57
    %v62 = vld [vmem:[#allocation2] sm:$0xff]
    %v63 = vld [vmem:[#allocation2 + $0x8] sm:$0xff]
    %v64 = vld [vmem:[#allocation2 + $0x10] sm:$0xff]
    %v65 = vld [vmem:[#allocation2 + $0x18] sm:$0xff]
    %vm72 = vcmask 1046528
    %v73 = vrot.slane %v54, 1
    %v74 = vrot.slane %v55, 1
    %v75 = vsel %vm72, %v73, %v74
    %v76 = vrot.slane %v56, 1
    %v77 = vsel %vm72, %v74, %v76
    %v78 = vrot.slane %v57, 1
    %v79 = vrot.slane %v58, 1
    %v80 = vsel %vm72, %v78, %v79
    %v81 = vrot.slane %v59, 1
    %v82 = vsel %vm72, %v79, %v81
    %v87 = vpack.c.bf16 %v77, %v75
    %v88 = vpack.c.bf16 %v82, %v80
    %s89 = scalar_lea.vmem [#allocation2], 32
    %v90 = vld [vmem:[%s89] sm:$0xff]
    %v91 = vld [vmem:[%s89 + $0x8] sm:$0xff]
    %v92 = vld [vmem:[%s89 + $0x10] sm:$0xff]
    %v93 = vld [vmem:[%s89 + $0x18] sm:$0xff]
    %v98 = vunpack.c.l.b16 %v90
    %v99 = vunpack.c.h.b16 %v90
    %v100 = vunpack.c.l.b16 %v91
    %v101 = vunpack.c.h.b16 %v91
    %v102 = vunpack.c.l.b16 %v92
    %v103 = vunpack.c.h.b16 %v92
    %v104 = vunpack.c.l.b16 %v93
    %v105 = vunpack.c.h.b16 %v93
    %v106 = vpack.c.b16 %v100, %v98
    %v107 = vpack.c.b16 %v101, %v99
    %v108 = vpack.c.b16 %v104, %v102
    %v109 = vpack.c.b16 %v105, %v103
    %vm114 = vcmask 261120
    %v116 = vsel %vm114, %v87, 0
    %v119 = vsel %vm114, %v88, 0
    %121 = vmatprep.subr.bf16.mxu0 0
    %122 = vmatpush1.bf16.msra.mxu0 0
    %123 = vmatprep.subr.bf16.mxu0 0
    %124 = vmatpush1.bf16.msra.mxu0 0
    %125 = vmatprep.subr.bf16.mxu0 0
    %126 = vmatpush1.bf16.msra.mxu0 0
    %127 = vmatprep.subr.bf16.mxu0 0
    %128 = vmatpush1.bf16.msra.mxu0 0
    %129 = vmatprep.subr.bf16.mxu0 0
    %130 = vmatpush1.bf16.msra.mxu0 0
    %131 = vmatprep.subr.bf16.mxu0 0
    %132 = vmatpush1.bf16.msra.mxu0 0
    %133 = vmatprep.subr.bf16.mxu0 %v109
    %134 = vmatpush1.bf16.msra.mxu0 %v108
    %135 = vmatprep.subr.bf16.mxu0 %v107
    %136 = vmatpush1.bf16.msra.mxu0 %v106
    %137 = vmatprep.subr.bf16.mxu0 0
    %138 = vmatpush2.bf16.msra.mxu0 0
    %139 = vmatprep.subr.bf16.mxu0 0
    %140 = vmatpush2.bf16.msra.mxu0 0
    %141 = vmatprep.subr.bf16.mxu0 0
    %142 = vmatpush2.bf16.msra.mxu0 0
    %143 = vmatprep.subr.bf16.mxu0 0
    %144 = vmatpush2.bf16.msra.mxu0 0
    %145 = vmatprep.subr.bf16.mxu0 0
    %146 = vmatpush2.bf16.msra.mxu0 0
    %147 = vmatprep.subr.bf16.mxu0 0
    %148 = vmatpush2.bf16.msra.mxu0 0
    %149 = vmatprep.subr.bf16.mxu0 0
    %150 = vmatpush2.bf16.msra.mxu0 0
    %151 = vmatprep.subr.bf16.mxu0 0
    %152 = vmatpush2.bf16.msra.mxu0 0
    %153 = vmatprep.mubr.bf16.mxu0 0
    %154 = vmatmul.mubr.bf16.gmra.mxu0 %v116
    %v155 = vpop.f32.mrf.mxu0
    %v156 = vadd.f32 0.0, %v155
    %v157 = vpop.f32.mrf.mxu0
    %v158 = vadd.f32 0.0, %v157
    %v159 = vpop.f32.mrf.mxu0
    %v160 = vadd.f32 0.0, %v159
    %v161 = vpop.f32.mrf.mxu0
    %v162 = vadd.f32 0.0, %v161
    %163 = vmatprep.mubr.bf16.mxu0 0
    %164 = vmatmul.mubr.bf16.gmra.mxu0 %v119
    %v165 = vpop.f32.mrf.mxu0
    %v166 = vadd.f32 0.0, %v165
    %v167 = vpop.f32.mrf.mxu0
    %v168 = vadd.f32 0.0, %v167
    %v169 = vpop.f32.mrf.mxu0
    %v170 = vadd.f32 0.0, %v169
    %v171 = vpop.f32.mrf.mxu0
    %v172 = vadd.f32 0.0, %v171
    %173 = vdwg.mxu0
    %v178 = vunpack.c.l.b16 %v62
    %v179 = vunpack.c.h.b16 %v62
    %v180 = vunpack.c.l.b16 %v63
    %v181 = vunpack.c.h.b16 %v63
    %v182 = vunpack.c.l.b16 %v64
    %v183 = vunpack.c.h.b16 %v64
    %v184 = vunpack.c.l.b16 %v65
    %v185 = vunpack.c.h.b16 %v65
    %v186 = vpack.c.b16 %v180, %v178
    %v187 = vpack.c.b16 %v181, %v179
    %v188 = vpack.c.b16 %v184, %v182
    %v189 = vpack.c.b16 %v185, %v183
    %v195 = vsel %vm114, %v60, 0
    %v198 = vsel %vm114, %v61, 0
    %200 = vmatprep.subr.bf16.mxu0 0
    %201 = vmatpush1.bf16.msra.mxu0 0
    %202 = vmatprep.subr.bf16.mxu0 0
    %203 = vmatpush1.bf16.msra.mxu0 0
    %204 = vmatprep.subr.bf16.mxu0 0
    %205 = vmatpush1.bf16.msra.mxu0 0
    %206 = vmatprep.subr.bf16.mxu0 0
    %207 = vmatpush1.bf16.msra.mxu0 0
    %208 = vmatprep.subr.bf16.mxu0 0
    %209 = vmatpush1.bf16.msra.mxu0 0
    %210 = vmatprep.subr.bf16.mxu0 0
    %211 = vmatpush1.bf16.msra.mxu0 0
    %212 = vmatprep.subr.bf16.mxu0 %v189
    %213 = vmatpush1.bf16.msra.mxu0 %v188
    %214 = vmatprep.subr.bf16.mxu0 %v187
    %215 = vmatpush1.bf16.msra.mxu0 %v186
    %216 = vmatprep.subr.bf16.mxu0 0
    %217 = vmatpush2.bf16.msra.mxu0 0
    %218 = vmatprep.subr.bf16.mxu0 0
    %219 = vmatpush2.bf16.msra.mxu0 0
    %220 = vmatprep.subr.bf16.mxu0 0
    %221 = vmatpush2.bf16.msra.mxu0 0
    %222 = vmatprep.subr.bf16.mxu0 0
    %223 = vmatpush2.bf16.msra.mxu0 0
    %224 = vmatprep.subr.bf16.mxu0 0
    %225 = vmatpush2.bf16.msra.mxu0 0
    %226 = vmatprep.subr.bf16.mxu0 0
    %227 = vmatpush2.bf16.msra.mxu0 0
    %228 = vmatprep.subr.bf16.mxu0 0
    %229 = vmatpush2.bf16.msra.mxu0 0
    %230 = vmatprep.subr.bf16.mxu0 0
    %231 = vmatpush2.bf16.msra.mxu0 0
    %232 = vmatprep.mubr.bf16.mxu0 0
    %233 = vmatmul.mubr.bf16.gmra.mxu0 %v195
    %v234 = vpop.f32.mrf.mxu0
    %v235 = vadd.f32 %v156, %v234
    %v236 = vpop.f32.mrf.mxu0
    %v237 = vadd.f32 %v158, %v236
    %v238 = vpop.f32.mrf.mxu0
    %v239 = vadd.f32 %v160, %v238
    %v240 = vpop.f32.mrf.mxu0
    %v241 = vadd.f32 %v162, %v240
    %242 = vmatprep.mubr.bf16.mxu0 0
    %243 = vmatmul.mubr.bf16.gmra.mxu0 %v198
    %v244 = vpop.f32.mrf.mxu0
    %v245 = vadd.f32 %v166, %v244
    %v246 = vpop.f32.mrf.mxu0
    %v247 = vadd.f32 %v168, %v246
    %v248 = vpop.f32.mrf.mxu0
    %v249 = vadd.f32 %v170, %v248
    %v250 = vpop.f32.mrf.mxu0
    %v251 = vadd.f32 %v172, %v250
    %252 = vdwg.mxu0
    %vm253 = vcmask 1045504
    %v254 = vrot.slane %v54, 2
    %v255 = vrot.slane %v55, 2
    %v256 = vsel %vm253, %v254, %v255
    %v257 = vrot.slane %v56, 2
    %v258 = vsel %vm253, %v255, %v257
    %v259 = vrot.slane %v57, 2
    %v260 = vrot.slane %v58, 2
    %v261 = vsel %vm253, %v259, %v260
    %v262 = vrot.slane %v59, 2
    %v263 = vsel %vm253, %v260, %v262
    %v268 = vpack.c.bf16 %v258, %v256
    %v269 = vpack.c.bf16 %v263, %v261
    %s270 = scalar_lea.vmem [#allocation2], 64
    %v271 = vld [vmem:[%s270] sm:$0xff]
    %v272 = vld [vmem:[%s270 + $0x8] sm:$0xff]
    %v273 = vld [vmem:[%s270 + $0x10] sm:$0xff]
    %v274 = vld [vmem:[%s270 + $0x18] sm:$0xff]
    %v279 = vunpack.c.l.b16 %v271
    %v280 = vunpack.c.h.b16 %v271
    %v281 = vunpack.c.l.b16 %v272
    %v282 = vunpack.c.h.b16 %v272
    %v283 = vunpack.c.l.b16 %v273
    %v284 = vunpack.c.h.b16 %v273
    %v285 = vunpack.c.l.b16 %v274
    %v286 = vunpack.c.h.b16 %v274
    %v287 = vpack.c.b16 %v281, %v279
    %v288 = vpack.c.b16 %v282, %v280
    %v289 = vpack.c.b16 %v285, %v283
    %v290 = vpack.c.b16 %v286, %v284
    %v296 = vsel %vm114, %v268, 0
    %v299 = vsel %vm114, %v269, 0
    %301 = vmatprep.subr.bf16.mxu0 0
    %302 = vmatpush1.bf16.msra.mxu0 0
    %303 = vmatprep.subr.bf16.mxu0 0
    %304 = vmatpush1.bf16.msra.mxu0 0
    %305 = vmatprep.subr.bf16.mxu0 0
    %306 = vmatpush1.bf16.msra.mxu0 0
    %307 = vmatprep.subr.bf16.mxu0 0
    %308 = vmatpush1.bf16.msra.mxu0 0
    %309 = vmatprep.subr.bf16.mxu0 0
    %310 = vmatpush1.bf16.msra.mxu0 0
    %311 = vmatprep.subr.bf16.mxu0 0
    %312 = vmatpush1.bf16.msra.mxu0 0
    %313 = vmatprep.subr.bf16.mxu0 %v290
    %314 = vmatpush1.bf16.msra.mxu0 %v289
    %315 = vmatprep.subr.bf16.mxu0 %v288
    %316 = vmatpush1.bf16.msra.mxu0 %v287
    %317 = vmatprep.subr.bf16.mxu0 0
    %318 = vmatpush2.bf16.msra.mxu0 0
    %319 = vmatprep.subr.bf16.mxu0 0
    %320 = vmatpush2.bf16.msra.mxu0 0
    %321 = vmatprep.subr.bf16.mxu0 0
    %322 = vmatpush2.bf16.msra.mxu0 0
    %323 = vmatprep.subr.bf16.mxu0 0
    %324 = vmatpush2.bf16.msra.mxu0 0
    %325 = vmatprep.subr.bf16.mxu0 0
    %326 = vmatpush2.bf16.msra.mxu0 0
    %327 = vmatprep.subr.bf16.mxu0 0
    %328 = vmatpush2.bf16.msra.mxu0 0
    %329 = vmatprep.subr.bf16.mxu0 0
    %330 = vmatpush2.bf16.msra.mxu0 0
    %331 = vmatprep.subr.bf16.mxu0 0
    %332 = vmatpush2.bf16.msra.mxu0 0
    %333 = vmatprep.mubr.bf16.mxu0 0
    %334 = vmatmul.mubr.bf16.gmra.mxu0 %v296
    %v335 = vpop.f32.mrf.mxu0
    %v336 = vadd.f32 0.0, %v335
    %v337 = vpop.f32.mrf.mxu0
    %v338 = vadd.f32 0.0, %v337
    %v339 = vpop.f32.mrf.mxu0
    %v340 = vadd.f32 0.0, %v339
    %v341 = vpop.f32.mrf.mxu0
    %v342 = vadd.f32 0.0, %v341
    %343 = vmatprep.mubr.bf16.mxu0 0
    %344 = vmatmul.mubr.bf16.gmra.mxu0 %v299
    %v345 = vpop.f32.mrf.mxu0
    %v346 = vadd.f32 0.0, %v345
    %v347 = vpop.f32.mrf.mxu0
    %v348 = vadd.f32 0.0, %v347
    %v349 = vpop.f32.mrf.mxu0
    %v350 = vadd.f32 0.0, %v349
    %v351 = vpop.f32.mrf.mxu0
    %v352 = vadd.f32 0.0, %v351
    %353 = vdwg.mxu0
    %v354 = vadd.f32 %v235, %v336
    %v355 = vadd.f32 %v237, %v338
    %v356 = vadd.f32 %v239, %v340
    %v357 = vadd.f32 %v241, %v342
    %v358 = vadd.f32 %v245, %v346
    %v359 = vadd.f32 %v247, %v348
    %v360 = vadd.f32 %v249, %v350
    %v361 = vadd.f32 %v251, %v352
    %vm362 = vcmask 1044480
    %v363 = vrot.slane %v54, 3
    %v364 = vrot.slane %v55, 3
    %v365 = vsel %vm362, %v363, %v364
    %v366 = vrot.slane %v56, 3
    %v367 = vsel %vm362, %v364, %v366
    %v368 = vrot.slane %v57, 3
    %v369 = vrot.slane %v58, 3
    %v370 = vsel %vm362, %v368, %v369
    %v371 = vrot.slane %v59, 3
    %v372 = vsel %vm362, %v369, %v371
    %v377 = vpack.c.bf16 %v367, %v365
    %v378 = vpack.c.bf16 %v372, %v370
    %s379 = scalar_lea.vmem [#allocation2], 96
    %v380 = vld [vmem:[%s379] sm:$0xff]
    %v381 = vld [vmem:[%s379 + $0x8] sm:$0xff]
    %v382 = vld [vmem:[%s379 + $0x10] sm:$0xff]
    %v383 = vld [vmem:[%s379 + $0x18] sm:$0xff]
    %v388 = vunpack.c.l.b16 %v380
    %v389 = vunpack.c.h.b16 %v380
    %v390 = vunpack.c.l.b16 %v381
    %v391 = vunpack.c.h.b16 %v381
    %v392 = vunpack.c.l.b16 %v382
    %v393 = vunpack.c.h.b16 %v382
    %v394 = vunpack.c.l.b16 %v383
    %v395 = vunpack.c.h.b16 %v383
    %v396 = vpack.c.b16 %v390, %v388
    %v397 = vpack.c.b16 %v391, %v389
    %v398 = vpack.c.b16 %v394, %v392
    %v399 = vpack.c.b16 %v395, %v393
    %v405 = vsel %vm114, %v377, 0
    %v408 = vsel %vm114, %v378, 0
    %410 = vmatprep.subr.bf16.mxu0 0
    %411 = vmatpush1.bf16.msra.mxu0 0
    %412 = vmatprep.subr.bf16.mxu0 0
    %413 = vmatpush1.bf16.msra.mxu0 0
    %414 = vmatprep.subr.bf16.mxu0 0
    %415 = vmatpush1.bf16.msra.mxu0 0
    %416 = vmatprep.subr.bf16.mxu0 0
    %417 = vmatpush1.bf16.msra.mxu0 0
    %418 = vmatprep.subr.bf16.mxu0 0
    %419 = vmatpush1.bf16.msra.mxu0 0
    %420 = vmatprep.subr.bf16.mxu0 0
    %421 = vmatpush1.bf16.msra.mxu0 0
    %422 = vmatprep.subr.bf16.mxu0 %v399
    %423 = vmatpush1.bf16.msra.mxu0 %v398
    %424 = vmatprep.subr.bf16.mxu0 %v397
    %425 = vmatpush1.bf16.msra.mxu0 %v396
    %426 = vmatprep.subr.bf16.mxu0 0
    %427 = vmatpush2.bf16.msra.mxu0 0
    %428 = vmatprep.subr.bf16.mxu0 0
    %429 = vmatpush2.bf16.msra.mxu0 0
    %430 = vmatprep.subr.bf16.mxu0 0
    %431 = vmatpush2.bf16.msra.mxu0 0
    %432 = vmatprep.subr.bf16.mxu0 0
    %433 = vmatpush2.bf16.msra.mxu0 0
    %434 = vmatprep.subr.bf16.mxu0 0
    %435 = vmatpush2.bf16.msra.mxu0 0
    %436 = vmatprep.subr.bf16.mxu0 0
    %437 = vmatpush2.bf16.msra.mxu0 0
    %438 = vmatprep.subr.bf16.mxu0 0
    %439 = vmatpush2.bf16.msra.mxu0 0
    %440 = vmatprep.subr.bf16.mxu0 0
    %441 = vmatpush2.bf16.msra.mxu0 0
    %442 = vmatprep.mubr.bf16.mxu0 0
    %443 = vmatmul.mubr.bf16.gmra.mxu0 %v405
    %v444 = vpop.f32.mrf.mxu0
    %v445 = vadd.f32 0.0, %v444
    %v446 = vpop.f32.mrf.mxu0
    %v447 = vadd.f32 0.0, %v446
    %v448 = vpop.f32.mrf.mxu0
    %v449 = vadd.f32 0.0, %v448
    %v450 = vpop.f32.mrf.mxu0
    %v451 = vadd.f32 0.0, %v450
    %452 = vmatprep.mubr.bf16.mxu0 0
    %453 = vmatmul.mubr.bf16.gmra.mxu0 %v408
    %v454 = vpop.f32.mrf.mxu0
    %v455 = vadd.f32 0.0, %v454
    %v456 = vpop.f32.mrf.mxu0
    %v457 = vadd.f32 0.0, %v456
    %v458 = vpop.f32.mrf.mxu0
    %v459 = vadd.f32 0.0, %v458
    %v460 = vpop.f32.mrf.mxu0
    %v461 = vadd.f32 0.0, %v460
    %462 = vdwg.mxu0
    %v463 = vadd.f32 %v354, %v445
    %v464 = vadd.f32 %v355, %v447
    %v465 = vadd.f32 %v356, %v449
    %v466 = vadd.f32 %v357, %v451
    %v467 = vadd.f32 %v358, %v455
    %v468 = vadd.f32 %v359, %v457
    %v469 = vadd.f32 %v360, %v459
    %v470 = vadd.f32 %v361, %v461
    %vm471 = vcmask 1043456
    %v472 = vrot.slane %v54, 4
    %v473 = vrot.slane %v55, 4
    %v474 = vsel %vm471, %v472, %v473
    %v475 = vrot.slane %v56, 4
    %v476 = vsel %vm471, %v473, %v475
    %v477 = vrot.slane %v57, 4
    %v478 = vrot.slane %v58, 4
    %v479 = vsel %vm471, %v477, %v478
    %v480 = vrot.slane %v59, 4
    %v481 = vsel %vm471, %v478, %v480
    %v486 = vpack.c.bf16 %v476, %v474
    %v487 = vpack.c.bf16 %v481, %v479
    %s488 = scalar_lea.vmem [#allocation2], 128
    %v489 = vld [vmem:[%s488] sm:$0xff]
    %v490 = vld [vmem:[%s488 + $0x8] sm:$0xff]
    %v491 = vld [vmem:[%s488 + $0x10] sm:$0xff]
    %v492 = vld [vmem:[%s488 + $0x18] sm:$0xff]
    %v497 = vunpack.c.l.b16 %v489
    %v498 = vunpack.c.h.b16 %v489
    %v499 = vunpack.c.l.b16 %v490
    %v500 = vunpack.c.h.b16 %v490
    %v501 = vunpack.c.l.b16 %v491
    %v502 = vunpack.c.h.b16 %v491
    %v503 = vunpack.c.l.b16 %v492
    %v504 = vunpack.c.h.b16 %v492
    %v505 = vpack.c.b16 %v499, %v497
    %v506 = vpack.c.b16 %v500, %v498
    %v507 = vpack.c.b16 %v503, %v501
    %v508 = vpack.c.b16 %v504, %v502
    %v514 = vsel %vm114, %v486, 0
    %v517 = vsel %vm114, %v487, 0
    %519 = vmatprep.subr.bf16.mxu0 0
    %520 = vmatpush1.bf16.msra.mxu0 0
    %521 = vmatprep.subr.bf16.mxu0 0
    %522 = vmatpush1.bf16.msra.mxu0 0
    %523 = vmatprep.subr.bf16.mxu0 0
    %524 = vmatpush1.bf16.msra.mxu0 0
    %525 = vmatprep.subr.bf16.mxu0 0
    %526 = vmatpush1.bf16.msra.mxu0 0
    %527 = vmatprep.subr.bf16.mxu0 0
    %528 = vmatpush1.bf16.msra.mxu0 0
    %529 = vmatprep.subr.bf16.mxu0 0
    %530 = vmatpush1.bf16.msra.mxu0 0
    %531 = vmatprep.subr.bf16.mxu0 %v508
    %532 = vmatpush1.bf16.msra.mxu0 %v507
    %533 = vmatprep.subr.bf16.mxu0 %v506
    %534 = vmatpush1.bf16.msra.mxu0 %v505
    %535 = vmatprep.subr.bf16.mxu0 0
    %536 = vmatpush2.bf16.msra.mxu0 0
    %537 = vmatprep.subr.bf16.mxu0 0
    %538 = vmatpush2.bf16.msra.mxu0 0
    %539 = vmatprep.subr.bf16.mxu0 0
    %540 = vmatpush2.bf16.msra.mxu0 0
    %541 = vmatprep.subr.bf16.mxu0 0
    %542 = vmatpush2.bf16.msra.mxu0 0
    %543 = vmatprep.subr.bf16.mxu0 0
    %544 = vmatpush2.bf16.msra.mxu0 0
    %545 = vmatprep.subr.bf16.mxu0 0
    %546 = vmatpush2.bf16.msra.mxu0 0
    %547 = vmatprep.subr.bf16.mxu0 0
    %548 = vmatpush2.bf16.msra.mxu0 0
    %549 = vmatprep.subr.bf16.mxu0 0
    %550 = vmatpush2.bf16.msra.mxu0 0
    %551 = vmatprep.mubr.bf16.mxu0 0
    %552 = vmatmul.mubr.bf16.gmra.mxu0 %v514
    %v553 = vpop.f32.mrf.mxu0
    %v554 = vadd.f32 0.0, %v553
    %v555 = vpop.f32.mrf.mxu0
    %v556 = vadd.f32 0.0, %v555
    %v557 = vpop.f32.mrf.mxu0
    %v558 = vadd.f32 0.0, %v557
    %v559 = vpop.f32.mrf.mxu0
    %v560 = vadd.f32 0.0, %v559
    %561 = vmatprep.mubr.bf16.mxu0 0
    %562 = vmatmul.mubr.bf16.gmra.mxu0 %v517
    %v563 = vpop.f32.mrf.mxu0
    %v564 = vadd.f32 0.0, %v563
    %v565 = vpop.f32.mrf.mxu0
    %v566 = vadd.f32 0.0, %v565
    %v567 = vpop.f32.mrf.mxu0
    %v568 = vadd.f32 0.0, %v567
    %v569 = vpop.f32.mrf.mxu0
    %v570 = vadd.f32 0.0, %v569
    %571 = vdwg.mxu0
    %v572 = vadd.f32 %v463, %v554
    %v573 = vadd.f32 %v464, %v556
    %v574 = vadd.f32 %v465, %v558
    %v575 = vadd.f32 %v466, %v560
    %v576 = vadd.f32 %v467, %v564
    %v577 = vadd.f32 %v468, %v566
    %v578 = vadd.f32 %v469, %v568
    %v579 = vadd.f32 %v470, %v570
    %vm580 = vcmask 1042432
    %v581 = vrot.slane %v54, 5
    %v582 = vrot.slane %v55, 5
    %v583 = vsel %vm580, %v581, %v582
    %v584 = vrot.slane %v56, 5
    %v585 = vsel %vm580, %v582, %v584
    %v586 = vrot.slane %v57, 5
    %v587 = vrot.slane %v58, 5
    %v588 = vsel %vm580, %v586, %v587
    %v589 = vrot.slane %v59, 5
    %v590 = vsel %vm580, %v587, %v589
    %v595 = vpack.c.bf16 %v585, %v583
    %v596 = vpack.c.bf16 %v590, %v588
    %s597 = scalar_lea.vmem [#allocation2], 160
    %v598 = vld [vmem:[%s597] sm:$0xff]
    %v599 = vld [vmem:[%s597 + $0x8] sm:$0xff]
    %v600 = vld [vmem:[%s597 + $0x10] sm:$0xff]
    %v601 = vld [vmem:[%s597 + $0x18] sm:$0xff]
    %v606 = vunpack.c.l.b16 %v598
    %v607 = vunpack.c.h.b16 %v598
    %v608 = vunpack.c.l.b16 %v599
    %v609 = vunpack.c.h.b16 %v599
    %v610 = vunpack.c.l.b16 %v600
    %v611 = vunpack.c.h.b16 %v600
    %v612 = vunpack.c.l.b16 %v601
    %v613 = vunpack.c.h.b16 %v601
    %v614 = vpack.c.b16 %v608, %v606
    %v615 = vpack.c.b16 %v609, %v607
    %v616 = vpack.c.b16 %v612, %v610
    %v617 = vpack.c.b16 %v613, %v611
    %v623 = vsel %vm114, %v595, 0
    %v626 = vsel %vm114, %v596, 0
    %628 = vmatprep.subr.bf16.mxu0 0
    %629 = vmatpush1.bf16.msra.mxu0 0
    %630 = vmatprep.subr.bf16.mxu0 0
    %631 = vmatpush1.bf16.msra.mxu0 0
    %632 = vmatprep.subr.bf16.mxu0 0
    %633 = vmatpush1.bf16.msra.mxu0 0
    %634 = vmatprep.subr.bf16.mxu0 0
    %635 = vmatpush1.bf16.msra.mxu0 0
    %636 = vmatprep.subr.bf16.mxu0 0
    %637 = vmatpush1.bf16.msra.mxu0 0
    %638 = vmatprep.subr.bf16.mxu0 0
    %639 = vmatpush1.bf16.msra.mxu0 0
    %640 = vmatprep.subr.bf16.mxu0 %v617
    %641 = vmatpush1.bf16.msra.mxu0 %v616
    %642 = vmatprep.subr.bf16.mxu0 %v615
    %643 = vmatpush1.bf16.msra.mxu0 %v614
    %644 = vmatprep.subr.bf16.mxu0 0
    %645 = vmatpush2.bf16.msra.mxu0 0
    %646 = vmatprep.subr.bf16.mxu0 0
    %647 = vmatpush2.bf16.msra.mxu0 0
    %648 = vmatprep.subr.bf16.mxu0 0
    %649 = vmatpush2.bf16.msra.mxu0 0
    %650 = vmatprep.subr.bf16.mxu0 0
    %651 = vmatpush2.bf16.msra.mxu0 0
    %652 = vmatprep.subr.bf16.mxu0 0
    %653 = vmatpush2.bf16.msra.mxu0 0
    %654 = vmatprep.subr.bf16.mxu0 0
    %655 = vmatpush2.bf16.msra.mxu0 0
    %656 = vmatprep.subr.bf16.mxu0 0
    %657 = vmatpush2.bf16.msra.mxu0 0
    %658 = vmatprep.subr.bf16.mxu0 0
    %659 = vmatpush2.bf16.msra.mxu0 0
    %660 = vmatprep.mubr.bf16.mxu0 0
    %661 = vmatmul.mubr.bf16.gmra.mxu0 %v623
    %v662 = vpop.f32.mrf.mxu0
    %v663 = vadd.f32 0.0, %v662
    %v664 = vpop.f32.mrf.mxu0
    %v665 = vadd.f32 0.0, %v664
    %v666 = vpop.f32.mrf.mxu0
    %v667 = vadd.f32 0.0, %v666
    %v668 = vpop.f32.mrf.mxu0
    %v669 = vadd.f32 0.0, %v668
    %670 = vmatprep.mubr.bf16.mxu0 0
    %671 = vmatmul.mubr.bf16.gmra.mxu0 %v626
    %v672 = vpop.f32.mrf.mxu0
    %v673 = vadd.f32 0.0, %v672
    %v674 = vpop.f32.mrf.mxu0
    %v675 = vadd.f32 0.0, %v674
    %v676 = vpop.f32.mrf.mxu0
    %v677 = vadd.f32 0.0, %v676
    %v678 = vpop.f32.mrf.mxu0
    %v679 = vadd.f32 0.0, %v678
    %680 = vdwg.mxu0
    %v681 = vadd.f32 %v572, %v663
    %v682 = vadd.f32 %v573, %v665
    %v683 = vadd.f32 %v574, %v667
    %v684 = vadd.f32 %v575, %v669
    %v685 = vadd.f32 %v576, %v673
    %v686 = vadd.f32 %v577, %v675
    %v687 = vadd.f32 %v578, %v677
    %v688 = vadd.f32 %v579, %v679
    %vm689 = vcmask 1041408
    %v690 = vrot.slane %v54, 6
    %v691 = vrot.slane %v55, 6
    %v692 = vsel %vm689, %v690, %v691
    %v693 = vrot.slane %v56, 6
    %v694 = vsel %vm689, %v691, %v693
    %v695 = vrot.slane %v57, 6
    %v696 = vrot.slane %v58, 6
    %v697 = vsel %vm689, %v695, %v696
    %v698 = vrot.slane %v59, 6
    %v699 = vsel %vm689, %v696, %v698
    %v704 = vpack.c.bf16 %v694, %v692
    %v705 = vpack.c.bf16 %v699, %v697
    %s706 = scalar_lea.vmem [#allocation2], 192
    %v707 = vld [vmem:[%s706] sm:$0xff]
    %v708 = vld [vmem:[%s706 + $0x8] sm:$0xff]
    %v709 = vld [vmem:[%s706 + $0x10] sm:$0xff]
    %v710 = vld [vmem:[%s706 + $0x18] sm:$0xff]
    %v715 = vunpack.c.l.b16 %v707
    %v716 = vunpack.c.h.b16 %v707
    %v717 = vunpack.c.l.b16 %v708
    %v718 = vunpack.c.h.b16 %v708
    %v719 = vunpack.c.l.b16 %v709
    %v720 = vunpack.c.h.b16 %v709
    %v721 = vunpack.c.l.b16 %v710
    %v722 = vunpack.c.h.b16 %v710
    %v723 = vpack.c.b16 %v717, %v715
    %v724 = vpack.c.b16 %v718, %v716
    %v725 = vpack.c.b16 %v721, %v719
    %v726 = vpack.c.b16 %v722, %v720
    %v732 = vsel %vm114, %v704, 0
    %v735 = vsel %vm114, %v705, 0
    %737 = vmatprep.subr.bf16.mxu0 0
    %738 = vmatpush1.bf16.msra.mxu0 0
    %739 = vmatprep.subr.bf16.mxu0 0
    %740 = vmatpush1.bf16.msra.mxu0 0
    %741 = vmatprep.subr.bf16.mxu0 0
    %742 = vmatpush1.bf16.msra.mxu0 0
    %743 = vmatprep.subr.bf16.mxu0 0
    %744 = vmatpush1.bf16.msra.mxu0 0
    %745 = vmatprep.subr.bf16.mxu0 0
    %746 = vmatpush1.bf16.msra.mxu0 0
    %747 = vmatprep.subr.bf16.mxu0 0
    %748 = vmatpush1.bf16.msra.mxu0 0
    %749 = vmatprep.subr.bf16.mxu0 %v726
    %750 = vmatpush1.bf16.msra.mxu0 %v725
    %751 = vmatprep.subr.bf16.mxu0 %v724
    %752 = vmatpush1.bf16.msra.mxu0 %v723
    %753 = vmatprep.subr.bf16.mxu0 0
    %754 = vmatpush2.bf16.msra.mxu0 0
    %755 = vmatprep.subr.bf16.mxu0 0
    %756 = vmatpush2.bf16.msra.mxu0 0
    %757 = vmatprep.subr.bf16.mxu0 0
    %758 = vmatpush2.bf16.msra.mxu0 0
    %759 = vmatprep.subr.bf16.mxu0 0
    %760 = vmatpush2.bf16.msra.mxu0 0
    %761 = vmatprep.subr.bf16.mxu0 0
    %762 = vmatpush2.bf16.msra.mxu0 0
    %763 = vmatprep.subr.bf16.mxu0 0
    %764 = vmatpush2.bf16.msra.mxu0 0
    %765 = vmatprep.subr.bf16.mxu0 0
    %766 = vmatpush2.bf16.msra.mxu0 0
    %767 = vmatprep.subr.bf16.mxu0 0
    %768 = vmatpush2.bf16.msra.mxu0 0
    %769 = vmatprep.mubr.bf16.mxu0 0
    %770 = vmatmul.mubr.bf16.gmra.mxu0 %v732
    %v771 = vpop.f32.mrf.mxu0
    %v772 = vadd.f32 0.0, %v771
    %v773 = vpop.f32.mrf.mxu0
    %v774 = vadd.f32 0.0, %v773
    %v775 = vpop.f32.mrf.mxu0
    %v776 = vadd.f32 0.0, %v775
    %v777 = vpop.f32.mrf.mxu0
    %v778 = vadd.f32 0.0, %v777
    %779 = vmatprep.mubr.bf16.mxu0 0
    %780 = vmatmul.mubr.bf16.gmra.mxu0 %v735
    %v781 = vpop.f32.mrf.mxu0
    %v782 = vadd.f32 0.0, %v781
    %v783 = vpop.f32.mrf.mxu0
    %v784 = vadd.f32 0.0, %v783
    %v785 = vpop.f32.mrf.mxu0
    %v786 = vadd.f32 0.0, %v785
    %v787 = vpop.f32.mrf.mxu0
    %v788 = vadd.f32 0.0, %v787
    %789 = vdwg.mxu0
    %v790 = vadd.f32 %v681, %v772
    %v791 = vadd.f32 %v682, %v774
    %v792 = vadd.f32 %v683, %v776
    %v793 = vadd.f32 %v684, %v778
    %v794 = vadd.f32 %v685, %v782
    %v795 = vadd.f32 %v686, %v784
    %v796 = vadd.f32 %v687, %v786
    %v797 = vadd.f32 %v688, %v788
    %vm798 = vcmask 1040384
    %v799 = vrot.slane %v54, 7
    %v800 = vrot.slane %v55, 7
    %v801 = vsel %vm798, %v799, %v800
    %v802 = vrot.slane %v56, 7
    %v803 = vsel %vm798, %v800, %v802
    %v804 = vrot.slane %v57, 7
    %v805 = vrot.slane %v58, 7
    %v806 = vsel %vm798, %v804, %v805
    %v807 = vrot.slane %v59, 7
    %v808 = vsel %vm798, %v805, %v807
    %v813 = vpack.c.bf16 %v803, %v801
    %v814 = vpack.c.bf16 %v808, %v806
    %s815 = scalar_lea.vmem [#allocation2], 224
    %v816 = vld [vmem:[%s815] sm:$0xff]
    %v817 = vld [vmem:[%s815 + $0x8] sm:$0xff]
    %v818 = vld [vmem:[%s815 + $0x10] sm:$0xff]
    %v819 = vld [vmem:[%s815 + $0x18] sm:$0xff]
    %v824 = vunpack.c.l.b16 %v816
    %v825 = vunpack.c.h.b16 %v816
    %v826 = vunpack.c.l.b16 %v817
    %v827 = vunpack.c.h.b16 %v817
    %v828 = vunpack.c.l.b16 %v818
    %v829 = vunpack.c.h.b16 %v818
    %v830 = vunpack.c.l.b16 %v819
    %v831 = vunpack.c.h.b16 %v819
    %v832 = vpack.c.b16 %v826, %v824
    %v833 = vpack.c.b16 %v827, %v825
    %v834 = vpack.c.b16 %v830, %v828
    %v835 = vpack.c.b16 %v831, %v829
    %v841 = vsel %vm114, %v813, 0
    %v844 = vsel %vm114, %v814, 0
    %846 = vmatprep.subr.bf16.mxu0 0
    %847 = vmatpush1.bf16.msra.mxu0 0
    %848 = vmatprep.subr.bf16.mxu0 0
    %849 = vmatpush1.bf16.msra.mxu0 0
    %850 = vmatprep.subr.bf16.mxu0 0
    %851 = vmatpush1.bf16.msra.mxu0 0
    %852 = vmatprep.subr.bf16.mxu0 0
    %853 = vmatpush1.bf16.msra.mxu0 0
    %854 = vmatprep.subr.bf16.mxu0 0
    %855 = vmatpush1.bf16.msra.mxu0 0
    %856 = vmatprep.subr.bf16.mxu0 0
    %857 = vmatpush1.bf16.msra.mxu0 0
    %858 = vmatprep.subr.bf16.mxu0 %v835
    %859 = vmatpush1.bf16.msra.mxu0 %v834
    %860 = vmatprep.subr.bf16.mxu0 %v833
    %861 = vmatpush1.bf16.msra.mxu0 %v832
    %862 = vmatprep.subr.bf16.mxu0 0
    %863 = vmatpush2.bf16.msra.mxu0 0
    %864 = vmatprep.subr.bf16.mxu0 0
    %865 = vmatpush2.bf16.msra.mxu0 0
    %866 = vmatprep.subr.bf16.mxu0 0
    %867 = vmatpush2.bf16.msra.mxu0 0
    %868 = vmatprep.subr.bf16.mxu0 0
    %869 = vmatpush2.bf16.msra.mxu0 0
    %870 = vmatprep.subr.bf16.mxu0 0
    %871 = vmatpush2.bf16.msra.mxu0 0
    %872 = vmatprep.subr.bf16.mxu0 0
    %873 = vmatpush2.bf16.msra.mxu0 0
    %874 = vmatprep.subr.bf16.mxu0 0
    %875 = vmatpush2.bf16.msra.mxu0 0
    %876 = vmatprep.subr.bf16.mxu0 0
    %877 = vmatpush2.bf16.msra.mxu0 0
    %878 = vmatprep.mubr.bf16.mxu0 0
    %879 = vmatmul.mubr.bf16.gmra.mxu0 %v841
    %v880 = vpop.f32.mrf.mxu0
    %v881 = vadd.f32 0.0, %v880
    %v882 = vpop.f32.mrf.mxu0
    %v883 = vadd.f32 0.0, %v882
    %v884 = vpop.f32.mrf.mxu0
    %v885 = vadd.f32 0.0, %v884
    %v886 = vpop.f32.mrf.mxu0
    %v887 = vadd.f32 0.0, %v886
    %888 = vmatprep.mubr.bf16.mxu0 0
    %889 = vmatmul.mubr.bf16.gmra.mxu0 %v844
    %v890 = vpop.f32.mrf.mxu0
    %v891 = vadd.f32 0.0, %v890
    %v892 = vpop.f32.mrf.mxu0
    %v893 = vadd.f32 0.0, %v892
    %v894 = vpop.f32.mrf.mxu0
    %v895 = vadd.f32 0.0, %v894
    %v896 = vpop.f32.mrf.mxu0
    %v897 = vadd.f32 0.0, %v896
    %898 = vdwg.mxu0
    %v899 = vadd.f32 %v790, %v881
    %v900 = vadd.f32 %v791, %v883
    %v901 = vadd.f32 %v792, %v885
    %v902 = vadd.f32 %v793, %v887
    %v903 = vadd.f32 %v794, %v891
    %v904 = vadd.f32 %v795, %v893
    %v905 = vadd.f32 %v796, %v895
    %v906 = vadd.f32 %v797, %v897
    %v907 = vpack.c.bf16 %v56, %v55
    %v908 = vpack.c.bf16 %v59, %v58
    %s909 = scalar_lea.vmem [#allocation2], 256
    %v910 = vld [vmem:[%s909] sm:$0xff]
    %v911 = vld [vmem:[%s909 + $0x8] sm:$0xff]
    %v912 = vld [vmem:[%s909 + $0x10] sm:$0xff]
    %v913 = vld [vmem:[%s909 + $0x18] sm:$0xff]
    %v918 = vunpack.c.l.b16 %v910
    %v919 = vunpack.c.h.b16 %v910
    %v920 = vunpack.c.l.b16 %v911
    %v921 = vunpack.c.h.b16 %v911
    %v922 = vunpack.c.l.b16 %v912
    %v923 = vunpack.c.h.b16 %v912
    %v924 = vunpack.c.l.b16 %v913
    %v925 = vunpack.c.h.b16 %v913
    %v926 = vpack.c.b16 %v920, %v918
    %v927 = vpack.c.b16 %v921, %v919
    %v928 = vpack.c.b16 %v924, %v922
    %v929 = vpack.c.b16 %v925, %v923
    %v935 = vsel %vm114, %v907, 0
    %v938 = vsel %vm114, %v908, 0
    %940 = vmatprep.subr.bf16.mxu0 0
    %941 = vmatpush1.bf16.msra.mxu0 0
    %942 = vmatprep.subr.bf16.mxu0 0
    %943 = vmatpush1.bf16.msra.mxu0 0
    %944 = vmatprep.subr.bf16.mxu0 0
    %945 = vmatpush1.bf16.msra.mxu0 0
    %946 = vmatprep.subr.bf16.mxu0 0
    %947 = vmatpush1.bf16.msra.mxu0 0
    %948 = vmatprep.subr.bf16.mxu0 0
    %949 = vmatpush1.bf16.msra.mxu0 0
    %950 = vmatprep.subr.bf16.mxu0 0
    %951 = vmatpush1.bf16.msra.mxu0 0
    %952 = vmatprep.subr.bf16.mxu0 %v929
    %953 = vmatpush1.bf16.msra.mxu0 %v928
    %954 = vmatprep.subr.bf16.mxu0 %v927
    %955 = vmatpush1.bf16.msra.mxu0 %v926
    %956 = vmatprep.subr.bf16.mxu0 0
    %957 = vmatpush2.bf16.msra.mxu0 0
    %958 = vmatprep.subr.bf16.mxu0 0
    %959 = vmatpush2.bf16.msra.mxu0 0
    %960 = vmatprep.subr.bf16.mxu0 0
    %961 = vmatpush2.bf16.msra.mxu0 0
    %962 = vmatprep.subr.bf16.mxu0 0
    %963 = vmatpush2.bf16.msra.mxu0 0
    %964 = vmatprep.subr.bf16.mxu0 0
    %965 = vmatpush2.bf16.msra.mxu0 0
    %966 = vmatprep.subr.bf16.mxu0 0
    %967 = vmatpush2.bf16.msra.mxu0 0
    %968 = vmatprep.subr.bf16.mxu0 0
    %969 = vmatpush2.bf16.msra.mxu0 0
    %970 = vmatprep.subr.bf16.mxu0 0
    %971 = vmatpush2.bf16.msra.mxu0 0
    %972 = vmatprep.mubr.bf16.mxu0 0
    %973 = vmatmul.mubr.bf16.gmra.mxu0 %v935
    %v974 = vpop.f32.mrf.mxu0
    %v975 = vadd.f32 0.0, %v974
    %v976 = vpop.f32.mrf.mxu0
    %v977 = vadd.f32 0.0, %v976
    %v978 = vpop.f32.mrf.mxu0
    %v979 = vadd.f32 0.0, %v978
    %v980 = vpop.f32.mrf.mxu0
    %v981 = vadd.f32 0.0, %v980
    %982 = vmatprep.mubr.bf16.mxu0 0
    %983 = vmatmul.mubr.bf16.gmra.mxu0 %v938
    %v984 = vpop.f32.mrf.mxu0
    %v985 = vadd.f32 0.0, %v984
    %v986 = vpop.f32.mrf.mxu0
    %v987 = vadd.f32 0.0, %v986
    %v988 = vpop.f32.mrf.mxu0
    %v989 = vadd.f32 0.0, %v988
    %v990 = vpop.f32.mrf.mxu0
    %v991 = vadd.f32 0.0, %v990
    %992 = vdwg.mxu0
    %v993 = vadd.f32 %v899, %v975
    %v994 = vadd.f32 %v900, %v977
    %v995 = vadd.f32 %v901, %v979
    %v996 = vadd.f32 %v902, %v981
    %v997 = vadd.f32 %v903, %v985
    %v998 = vadd.f32 %v904, %v987
    %v999 = vadd.f32 %v905, %v989
    %v1000 = vadd.f32 %v906, %v991
    %v1001 = vld [vmem:[%s2] sm:$0x3]
    %v1003 = vlaneseq
    %v1004 = vshrl.u32 %v1003, 7
    %v1005 = vsub.s32 0, %v1004
    %v1006 = vrot.slane %v1001, %v1005
    %v1007 = vlaneseq
    %v1008 = vshrl.u32 %v1007, 7
    %v1009 = vsub.s32 1, %v1008
    %v1010 = vrot.slane %v1001, %v1009
    %v1013 = vadd.f32 %v993, %v1006
    %v1014 = vadd.f32 %v994, %v1010
    %v1015 = vadd.f32 %v995, %v1006
    %v1016 = vadd.f32 %v996, %v1010
    %v1017 = vadd.f32 %v997, %v1006
    %v1018 = vadd.f32 %v998, %v1010
    %v1019 = vadd.f32 %v999, %v1006
    %v1020 = vadd.f32 %v1000, %v1010
    %v1021 = vmax.f32 %v1014, %v1016
    %v1022 = vrot.slane %v1021, 4
    %v1023 = vmax.f32 %v1021, %v1022
    %v1024 = vrot.slane %v1023, 2
    %v1025 = vmax.f32 %v1023, %v1024
    %v1026 = vrot.slane %v1025, 1
    %v1027 = vmax.f32 %v1025, %v1026
    %v1028 = vmax.f32 %v1018, %v1020
    %v1029 = vrot.slane %v1028, 4
    %v1030 = vmax.f32 %v1028, %v1029
    %v1031 = vrot.slane %v1030, 2
    %v1032 = vmax.f32 %v1030, %v1031
    %v1033 = vrot.slane %v1032, 1
    %v1034 = vmax.f32 %v1032, %v1033
    %v1035 = vsub.f32 %v1014, %v1027
    %v1036 = vsub.f32 %v1016, %v1027
    %v1037 = vsub.f32 %v1018, %v1034
    %v1038 = vsub.f32 %v1020, %v1034
    %v1039 = vmul.f32 %v1035, 1.442695
    %v1040 = vpow.pop %v1039
    %v1041 = vmul.f32 %v1036, 1.442695
    %v1042 = vpow.pop %v1041
    %v1043 = vmul.f32 %v1037, 1.442695
    %v1044 = vpow.pop %v1043
    %v1045 = vmul.f32 %v1038, 1.442695
    %v1046 = vpow.pop %v1045
    %v1047 = vadd.f32 %v1040, %v1042
    %v1048 = vrot.slane %v1047, 4
    %v1049 = vadd.f32 %v1047, %v1048
    %v1050 = vrot.slane %v1049, 2
    %v1051 = vadd.f32 %v1049, %v1050
    %v1052 = vrot.slane %v1051, 1
    %v1053 = vadd.f32 %v1051, %v1052
    %v1054 = vadd.f32 %v1044, %v1046
    %v1055 = vrot.slane %v1054, 4
    %v1056 = vadd.f32 %v1054, %v1055
    %v1057 = vrot.slane %v1056, 2
    %v1058 = vadd.f32 %v1056, %v1057
    %v1059 = vrot.slane %v1058, 1
    %v1060 = vadd.f32 %v1058, %v1059
    %v1061 = vrcp.pop %v1053
    %v1062 = vrcp.pop %v1060
    %v1063 = vmul.f32 %v1040, %v1061
    %v1064 = vmul.f32 %v1042, %v1061
    %v1065 = vmul.f32 %v1044, %v1062
    %v1066 = vmul.f32 %v1046, %v1062
    %v1067 = vmul.f32 %v1013, %v1063
    %v1068 = vmul.f32 %v1015, %v1064
    %v1069 = vmul.f32 %v1017, %v1065
    %v1070 = vmul.f32 %v1019, %v1066
    %v1071 = vadd.f32 %v1067, %v1068
    %v1072 = vrot.slane %v1071, 4
    %v1073 = vadd.f32 %v1071, %v1072
    %v1074 = vrot.slane %v1073, 2
    %v1075 = vadd.f32 %v1073, %v1074
    %v1076 = vrot.slane %v1075, 1
    %v1077 = vadd.f32 %v1075, %v1076
    %v1078 = vadd.f32 %v1069, %v1070
    %v1079 = vrot.slane %v1078, 4
    %v1080 = vadd.f32 %v1078, %v1079
    %v1081 = vrot.slane %v1080, 2
    %v1082 = vadd.f32 %v1080, %v1081
    %v1083 = vrot.slane %v1082, 1
    %v1084 = vadd.f32 %v1082, %v1083
    %v1085 = vmax.f32 %v1013, %v1015
    %v1086 = vrot.slane %v1085, 4
    %v1087 = vmax.f32 %v1085, %v1086
    %v1088 = vrot.slane %v1087, 2
    %v1089 = vmax.f32 %v1087, %v1088
    %v1090 = vrot.slane %v1089, 1
    %v1091 = vmax.f32 %v1089, %v1090
    %v1092 = vmax.f32 %v1017, %v1019
    %v1093 = vrot.slane %v1092, 4
    %v1094 = vmax.f32 %v1092, %v1093
    %v1095 = vrot.slane %v1094, 2
    %v1096 = vmax.f32 %v1094, %v1095
    %v1097 = vrot.slane %v1096, 1
    %v1098 = vmax.f32 %v1096, %v1097
    %vm1101 = vcmask 1041409
    %v1102 = vsel %vm1101, %v1084, %v1077
    %v1106 = vsel %vm1101, %v1098, %v1091
    %v1108 = vpack.c.bf16 %v1102, %v1102
    %v1109 = vpack.c.bf16 %v1106, %v1106
    %v1110 = vld [vmem:[%s3] sm:$0xf]
    %v1111 = vld [vmem:[%s3 + $0x4] sm:$0xf]
    %v1112 = vld [vmem:[%s3 + $0x8] sm:$0xf]
    %v1113 = vld [vmem:[%s3 + $0xc] sm:$0xf]
    %v1114 = vld [vmem:[%s3 + $0x10] sm:$0xf]
    %v1115 = vld [vmem:[%s3 + $0x14] sm:$0xf]
    %v1116 = vld [vmem:[%s3 + $0x18] sm:$0xf]
    %v1117 = vld [vmem:[%s3 + $0x1c] sm:$0xf]
    %v1118 = vld [vmem:[%s3 + $0x20] sm:$0xf]
    %v1119 = vld [vmem:[%s3 + $0x24] sm:$0xf]
    %v1120 = vld [vmem:[%s3 + $0x28] sm:$0xf]
    %v1121 = vld [vmem:[%s3 + $0x2c] sm:$0xf]
    %v1122 = vld [vmem:[%s3 + $0x30] sm:$0xf]
    %v1123 = vld [vmem:[%s3 + $0x34] sm:$0xf]
    %v1124 = vld [vmem:[%s3 + $0x38] sm:$0xf]
    %v1125 = vld [vmem:[%s3 + $0x3c] sm:$0xf]
    %v1126 = vld [vmem:[%s3 + $0x40] sm:$0xf]
    %v1127 = vld [vmem:[%s3 + $0x44] sm:$0xf]
    %v1128 = vld [vmem:[%s3 + $0x48] sm:$0xf]
    %v1129 = vld [vmem:[%s3 + $0x4c] sm:$0xf]
    %v1130 = vld [vmem:[%s3 + $0x50] sm:$0xf]
    %v1131 = vld [vmem:[%s3 + $0x54] sm:$0xf]
    %v1132 = vld [vmem:[%s3 + $0x58] sm:$0xf]
    %v1133 = vld [vmem:[%s3 + $0x5c] sm:$0xf]
    %v1134 = vld [vmem:[%s3 + $0x60] sm:$0xf]
    %v1135 = vld [vmem:[%s3 + $0x64] sm:$0xf]
    %v1136 = vld [vmem:[%s3 + $0x68] sm:$0xf]
    %v1137 = vld [vmem:[%s3 + $0x6c] sm:$0xf]
    %v1138 = vld [vmem:[%s3 + $0x70] sm:$0xf]
    %v1139 = vld [vmem:[%s3 + $0x74] sm:$0xf]
    %v1140 = vld [vmem:[%s3 + $0x78] sm:$0xf]
    %v1141 = vld [vmem:[%s3 + $0x7c] sm:$0xf]
    %v1142 = vld [vmem:[%s4] sm:$0x1]
    %v1144 = vlaneseq
    %v1145 = vshrl.u32 %v1144, 7
    %v1146 = vsub.s32 0, %v1145
    %v1147 = vrot.slane %v1142, %v1146
    %v1181 = vunpack.c.l.b16 %v1110
    %v1182 = vunpack.c.l.b16 %v1111
    %v1183 = vunpack.c.l.b16 %v1112
    %v1184 = vunpack.c.l.b16 %v1113
    %v1185 = vunpack.c.l.b16 %v1114
    %v1186 = vunpack.c.l.b16 %v1115
    %v1187 = vunpack.c.l.b16 %v1116
    %v1188 = vunpack.c.l.b16 %v1117
    %v1189 = vunpack.c.l.b16 %v1118
    %v1190 = vunpack.c.l.b16 %v1119
    %v1191 = vunpack.c.l.b16 %v1120
    %v1192 = vunpack.c.l.b16 %v1121
    %v1193 = vunpack.c.l.b16 %v1122
    %v1194 = vunpack.c.l.b16 %v1123
    %v1195 = vunpack.c.l.b16 %v1124
    %v1196 = vunpack.c.l.b16 %v1125
    %v1197 = vunpack.c.l.b16 %v1126
    %v1198 = vunpack.c.l.b16 %v1127
    %v1199 = vunpack.c.l.b16 %v1128
    %v1200 = vunpack.c.l.b16 %v1129
    %v1201 = vunpack.c.l.b16 %v1130
    %v1202 = vunpack.c.l.b16 %v1131
    %v1203 = vunpack.c.l.b16 %v1132
    %v1204 = vunpack.c.l.b16 %v1133
    %v1205 = vunpack.c.l.b16 %v1134
    %v1206 = vunpack.c.l.b16 %v1135
    %v1207 = vunpack.c.l.b16 %v1136
    %v1208 = vunpack.c.l.b16 %v1137
    %v1209 = vunpack.c.l.b16 %v1138
    %v1210 = vunpack.c.l.b16 %v1139
    %v1211 = vunpack.c.l.b16 %v1140
    %v1212 = vunpack.c.l.b16 %v1141
    %v1213 = vpack.c.b16 %v1182, %v1181
    %v1214 = vpack.c.b16 %v1184, %v1183
    %v1215 = vpack.c.b16 %v1186, %v1185
    %v1216 = vpack.c.b16 %v1188, %v1187
    %v1217 = vpack.c.b16 %v1190, %v1189
    %v1218 = vpack.c.b16 %v1192, %v1191
    %v1219 = vpack.c.b16 %v1194, %v1193
    %v1220 = vpack.c.b16 %v1196, %v1195
    %v1221 = vpack.c.b16 %v1198, %v1197
    %v1222 = vpack.c.b16 %v1200, %v1199
    %v1223 = vpack.c.b16 %v1202, %v1201
    %v1224 = vpack.c.b16 %v1204, %v1203
    %v1225 = vpack.c.b16 %v1206, %v1205
    %v1226 = vpack.c.b16 %v1208, %v1207
    %v1227 = vpack.c.b16 %v1210, %v1209
    %v1228 = vpack.c.b16 %v1212, %v1211
    %1245 = vmatprep.subr.bf16.mxu0 0
    %1246 = vmatpush1.bf16.msra.mxu0 %v1220
    %1247 = vmatprep.subr.bf16.mxu0 0
    %1248 = vmatpush1.bf16.msra.mxu0 %v1219
    %1249 = vmatprep.subr.bf16.mxu0 0
    %1250 = vmatpush1.bf16.msra.mxu0 %v1218
    %1251 = vmatprep.subr.bf16.mxu0 0
    %1252 = vmatpush1.bf16.msra.mxu0 %v1217
    %1253 = vmatprep.subr.bf16.mxu0 0
    %1254 = vmatpush1.bf16.msra.mxu0 %v1216
    %1255 = vmatprep.subr.bf16.mxu0 0
    %1256 = vmatpush1.bf16.msra.mxu0 %v1215
    %1257 = vmatprep.subr.bf16.mxu0 0
    %1258 = vmatpush1.bf16.msra.mxu0 %v1214
    %1259 = vmatprep.subr.bf16.mxu0 0
    %1260 = vmatpush1.bf16.msra.mxu0 %v1213
    %1261 = vmatprep.subr.bf16.mxu0 0
    %1262 = vmatpush2.bf16.msra.mxu0 %v1228
    %1263 = vmatprep.subr.bf16.mxu0 0
    %1264 = vmatpush2.bf16.msra.mxu0 %v1227
    %1265 = vmatprep.subr.bf16.mxu0 0
    %1266 = vmatpush2.bf16.msra.mxu0 %v1226
    %1267 = vmatprep.subr.bf16.mxu0 0
    %1268 = vmatpush2.bf16.msra.mxu0 %v1225
    %1269 = vmatprep.subr.bf16.mxu0 0
    %1270 = vmatpush2.bf16.msra.mxu0 %v1224
    %1271 = vmatprep.subr.bf16.mxu0 0
    %1272 = vmatpush2.bf16.msra.mxu0 %v1223
    %1273 = vmatprep.subr.bf16.mxu0 0
    %1274 = vmatpush2.bf16.msra.mxu0 %v1222
    %1275 = vmatprep.subr.bf16.mxu0 0
    %1276 = vmatpush2.bf16.msra.mxu0 %v1221
    %1277 = vmatprep.mubr.bf16.mxu0 %v1109
    %1278 = vmatmul.mubr.bf16.gmra.mxu0 %v1108
    %v1279 = vpop.f32.mrf.mxu0
    %v1280 = vadd.f32 %v1147, %v1279
    %v1281 = vpop.f32.mrf.mxu0
    %v1282 = vpop.f32.mrf.mxu0
    %v1283 = vpop.f32.mrf.mxu0
    %1284 = vdwg.mxu0
    %v1285 = vmax.f32 %v1280, 0.0
    %v1286 = vpack.c.bf16 %v1285, %v1285
    %v1287 = vld [vmem:[%s5] sm:$0xf]
    %v1288 = vld [vmem:[%s5 + $0x4] sm:$0xf]
    %v1289 = vld [vmem:[%s5 + $0x8] sm:$0xf]
    %v1290 = vld [vmem:[%s5 + $0xc] sm:$0xf]
    %v1291 = vld [vmem:[%s6] sm:$0x1]
    %v1293 = vlaneseq
    %v1294 = vshrl.u32 %v1293, 7
    %v1295 = vsub.s32 0, %v1294
    %v1296 = vrot.slane %v1291, %v1295
    %v1302 = vunpack.c.l.b16 %v1287
    %v1303 = vunpack.c.l.b16 %v1288
    %v1304 = vunpack.c.l.b16 %v1289
    %v1305 = vunpack.c.l.b16 %v1290
    %v1306 = vpack.c.b16 %v1303, %v1302
    %v1307 = vpack.c.b16 %v1305, %v1304
    %v1311 = vsel %vm114, %v1286, 0
    %1313 = vmatprep.subr.bf16.mxu0 0
    %1314 = vmatpush1.bf16.msra.mxu0 0
    %1315 = vmatprep.subr.bf16.mxu0 0
    %1316 = vmatpush1.bf16.msra.mxu0 0
    %1317 = vmatprep.subr.bf16.mxu0 0
    %1318 = vmatpush1.bf16.msra.mxu0 0
    %1319 = vmatprep.subr.bf16.mxu0 0
    %1320 = vmatpush1.bf16.msra.mxu0 0
    %1321 = vmatprep.subr.bf16.mxu0 0
    %1322 = vmatpush1.bf16.msra.mxu0 0
    %1323 = vmatprep.subr.bf16.mxu0 0
    %1324 = vmatpush1.bf16.msra.mxu0 0
    %1325 = vmatprep.subr.bf16.mxu0 0
    %1326 = vmatpush1.bf16.msra.mxu0 %v1307
    %1327 = vmatprep.subr.bf16.mxu0 0
    %1328 = vmatpush1.bf16.msra.mxu0 %v1306
    %1329 = vmatprep.subr.bf16.mxu0 0
    %1330 = vmatpush2.bf16.msra.mxu0 0
    %1331 = vmatprep.subr.bf16.mxu0 0
    %1332 = vmatpush2.bf16.msra.mxu0 0
    %1333 = vmatprep.subr.bf16.mxu0 0
    %1334 = vmatpush2.bf16.msra.mxu0 0
    %1335 = vmatprep.subr.bf16.mxu0 0
    %1336 = vmatpush2.bf16.msra.mxu0 0
    %1337 = vmatprep.subr.bf16.mxu0 0
    %1338 = vmatpush2.bf16.msra.mxu0 0
    %1339 = vmatprep.subr.bf16.mxu0 0
    %1340 = vmatpush2.bf16.msra.mxu0 0
    %1341 = vmatprep.subr.bf16.mxu0 0
    %1342 = vmatpush2.bf16.msra.mxu0 0
    %1343 = vmatprep.subr.bf16.mxu0 0
    %1344 = vmatpush2.bf16.msra.mxu0 0
    %1345 = vmatprep.mubr.bf16.mxu0 0
    %1346 = vmatmul.mubr.bf16.gmra.mxu0 %v1311
    %v1347 = vpop.f32.mrf.mxu0
    %v1348 = vadd.f32 %v1296, %v1347
    %v1349 = vpop.f32.mrf.mxu0
    %v1350 = vpop.f32.mrf.mxu0
    %v1351 = vpop.f32.mrf.mxu0
    %1352 = vdwg.mxu0
    %v1353 = vmax.f32 %v1348, 0.0
    %v1354 = vpack.c.bf16 %v1353, %v1353
    %v1355 = vld [vmem:[%s7] sm:$0xf]
    %v1356 = vld [vmem:[%s7 + $0x4] sm:$0x3]
    %v1357 = vld [vmem:[%s8] sm:$0x1]
    %v1359 = vlaneseq
    %v1360 = vshrl.u32 %v1359, 7
    %v1361 = vsub.s32 0, %v1360
    %v1362 = vrot.slane %v1357, %v1361
    %v1366 = vunpack.c.l.b16 %v1355
    %v1367 = vunpack.c.l.b16 %v1356
    %v1368 = vpack.c.b16 %v1367, %v1366
    %vm1369 = vcmask 89088
    %v1371 = vsel %vm1369, %v1354, 0
    %v1373 = vsel %vm362, 4294967295, 65535
    %v1374 = vsel %vm253, %v1373, 0
    %v1376 = vand.u32 %v1368, %v1374
    %1378 = vmatprep.subr.bf16.mxu0 0
    %1379 = vmatpush1.bf16.msra.mxu0 0
    %1380 = vmatprep.subr.bf16.mxu0 0
    %1381 = vmatpush1.bf16.msra.mxu0 0
    %1382 = vmatprep.subr.bf16.mxu0 0
    %1383 = vmatpush1.bf16.msra.mxu0 0
    %1384 = vmatprep.subr.bf16.mxu0 0
    %1385 = vmatpush1.bf16.msra.mxu0 0
    %1386 = vmatprep.subr.bf16.mxu0 0
    %1387 = vmatpush1.bf16.msra.mxu0 0
    %1388 = vmatprep.subr.bf16.mxu0 0
    %1389 = vmatpush1.bf16.msra.mxu0 0
    %1390 = vmatprep.subr.bf16.mxu0 0
    %1391 = vmatpush1.bf16.msra.mxu0 0
    %1392 = vmatprep.subr.bf16.mxu0 0
    %1393 = vmatpush1.bf16.msra.mxu0 %v1376
    %1394 = vmatprep.subr.bf16.mxu0 0
    %1395 = vmatpush2.bf16.msra.mxu0 0
    %1396 = vmatprep.subr.bf16.mxu0 0
    %1397 = vmatpush2.bf16.msra.mxu0 0
    %1398 = vmatprep.subr.bf16.mxu0 0
    %1399 = vmatpush2.bf16.msra.mxu0 0
    %1400 = vmatprep.subr.bf16.mxu0 0
    %1401 = vmatpush2.bf16.msra.mxu0 0
    %1402 = vmatprep.subr.bf16.mxu0 0
    %1403 = vmatpush2.bf16.msra.mxu0 0
    %1404 = vmatprep.subr.bf16.mxu0 0
    %1405 = vmatpush2.bf16.msra.mxu0 0
    %1406 = vmatprep.subr.bf16.mxu0 0
    %1407 = vmatpush2.bf16.msra.mxu0 0
    %1408 = vmatprep.subr.bf16.mxu0 0
    %1409 = vmatpush2.bf16.msra.mxu0 0
    %1410 = vmatprep.mubr.bf16.mxu0 0
    %1411 = vmatmul.mubr.bf16.gmra.mxu0 %v1371
    %v1412 = vpop.f32.mrf.mxu0
    %v1413 = vadd.f32 %v1362, %v1412
    %v1414 = vpop.f32.mrf.mxu0
    %v1415 = vpop.f32.mrf.mxu0
    %v1416 = vpop.f32.mrf.mxu0
    %1417 = vdwg.mxu0
    %v1418 = vmax.f32 %v1413, 0.0
    %v1419 = vpack.c.bf16 %v1418, %v1418
    %v1420 = vld [vmem:[%s9] sm:$0xf]
    %v1421 = vld [vmem:[%s9 + $0x4] sm:$0xf]
    %v1422 = vld [vmem:[%s9 + $0x8] sm:$0xf]
    %v1423 = vld [vmem:[%s9 + $0xc] sm:$0xf]
    %v1424 = vld [vmem:[%s10] sm:$0x1]
    %v1426 = vlaneseq
    %v1427 = vshrl.u32 %v1426, 7
    %v1428 = vsub.s32 0, %v1427
    %v1429 = vrot.slane %v1424, %v1428
    %v1435 = vunpack.c.l.b16 %v1420
    %v1436 = vunpack.c.l.b16 %v1421
    %v1437 = vunpack.c.l.b16 %v1422
    %v1438 = vunpack.c.l.b16 %v1423
    %v1439 = vpack.c.b16 %v1436, %v1435
    %v1440 = vpack.c.b16 %v1438, %v1437
    %v1444 = vsel %vm114, %v1419, 0
    %1446 = vmatprep.subr.bf16.mxu0 0
    %1447 = vmatpush1.bf16.msra.mxu0 0
    %1448 = vmatprep.subr.bf16.mxu0 0
    %1449 = vmatpush1.bf16.msra.mxu0 0
    %1450 = vmatprep.subr.bf16.mxu0 0
    %1451 = vmatpush1.bf16.msra.mxu0 0
    %1452 = vmatprep.subr.bf16.mxu0 0
    %1453 = vmatpush1.bf16.msra.mxu0 0
    %1454 = vmatprep.subr.bf16.mxu0 0
    %1455 = vmatpush1.bf16.msra.mxu0 0
    %1456 = vmatprep.subr.bf16.mxu0 0
    %1457 = vmatpush1.bf16.msra.mxu0 0
    %1458 = vmatprep.subr.bf16.mxu0 0
    %1459 = vmatpush1.bf16.msra.mxu0 %v1440
    %1460 = vmatprep.subr.bf16.mxu0 0
    %1461 = vmatpush1.bf16.msra.mxu0 %v1439
    %1462 = vmatprep.subr.bf16.mxu0 0
    %1463 = vmatpush2.bf16.msra.mxu0 0
    %1464 = vmatprep.subr.bf16.mxu0 0
    %1465 = vmatpush2.bf16.msra.mxu0 0
    %1466 = vmatprep.subr.bf16.mxu0 0
    %1467 = vmatpush2.bf16.msra.mxu0 0
    %1468 = vmatprep.subr.bf16.mxu0 0
    %1469 = vmatpush2.bf16.msra.mxu0 0
    %1470 = vmatprep.subr.bf16.mxu0 0
    %1471 = vmatpush2.bf16.msra.mxu0 0
    %1472 = vmatprep.subr.bf16.mxu0 0
    %1473 = vmatpush2.bf16.msra.mxu0 0
    %1474 = vmatprep.subr.bf16.mxu0 0
    %1475 = vmatpush2.bf16.msra.mxu0 0
    %1476 = vmatprep.subr.bf16.mxu0 0
    %1477 = vmatpush2.bf16.msra.mxu0 0
    %1478 = vmatprep.mubr.bf16.mxu0 0
    %1479 = vmatmul.mubr.bf16.gmra.mxu0 %v1444
    %v1480 = vpop.f32.mrf.mxu0
    %v1481 = vadd.f32 %v1429, %v1480
    %v1482 = vpop.f32.mrf.mxu0
    %v1483 = vpop.f32.mrf.mxu0
    %v1484 = vpop.f32.mrf.mxu0
    %1485 = vdwg.mxu0
    %1486 = vst [vmem:[#allocation5] sm:$0x3] %v1481
    // Predicated region
    $region50: #{energy_transfer_forward.1} parent=1 // pred_check
      _
    $region51: #{energy_transfer_forward.1} parent=1 // pred_check_branch
      %1488 = sbr.rel (0) target = $region53
    $region52: #{energy_transfer_forward.1} parent=1 // pred_region
      %s1490 = ssub.s32 32, 32
      %1491 = vsyncadd [#allocation4], %s1490
      %s1493 = sshll.u32 [#allocation5], 4
      %s1494 = int_to_ptr.vmem [resolvable:$true] %s1493
      %1496 = dma.vmem_to_hbm [thread:$0]  %s1494, 32, %s11, [#allocation4]
    $region53: #{energy_transfer_forward.1} parent=1 // pred_fallthru
      _
    // Predicated region
    $region54: #{energy_transfer_forward.1} parent=1 // pred_check
      _
    $region55: #{energy_transfer_forward.1} parent=1 // pred_check_branch
      %1498 = sbr.rel (0) target = $region57
    $region56: #{energy_transfer_forward.1} parent=1 // pred_region
      %1499 = dma.done [#allocation4], 32
    $region57: #{energy_transfer_forward.1} parent=1 // pred_fallthru
      _
    %1500 = vsyncpa [#allocation3], 1
    %1501 = vsyncpa [#allocation4], 1

</llo_original>
